<compile_context>
chip_gen: v5e
topology: v5e:2x2
jax: 0.10.0
libtpu: 0.0.40
codegen_flags: <defaults>
</compile_context>

<pallas_src>
import functools

import numpy as np
import jax
import jax.numpy as jnp
from jax import lax
from jax.experimental import pallas as pl
from jax.experimental.pallas import tpu as pltpu

_NEG_BIG = -1e30
_MAX_TB = 256          # upper bound on batch rows per grid step (multiple of 8)


# ----------------------------- device-generation VMEM model -------------------

def _vmem_physical_bytes():
    try:
        kind = jax.devices()[0].device_kind.lower()
    except Exception:
        kind = ""
    if "v2" in kind or "v3" in kind:
        return 16 << 20
    if any(t in kind for t in ("v4", "v5", "v6")):   # v4 / v5e / v5p / v6e: 128 MiB physical
        return 128 << 20
    return 64 << 20                                   # v7x (and unknown): be conservative


_VMEM_PHYS = _vmem_physical_bytes()
_VMEM_LIMIT = int(_VMEM_PHYS * 3 // 4)     # scoped VMEM we request from the compiler
_VMEM_BUDGET = _VMEM_LIMIT // 2            # what we size the batch tile (TB) against


def _round_up(x, m):
    return ((x + m - 1) // m) * m


def _per_row_bytes(D, F, M, max_tab_rows):
    """Rough live-VMEM bytes per batch row inside the fused kernel."""
    S = F + M
    vec = 4 * (S * D              # gathered follow/member embeddings (f32)
               + S * max_tab_rows  # one-hot gather matrices (f32, worst case)
               + S * 16            # attention-MLP hidden activations
               + 4 * S             # score / weight / mask temporaries
               + 8 * D)            # (TB, D) temporaries (ctx, agg, u, it, ...)
    idx = 2 * 4 * (F + M + 4)      # double-buffered int32 index / length blocks
    return vec + idx


def _pick_tb(batch, per_row_bytes):
    b8 = _round_up(max(int(batch), 1), 8)
    fit = max(8, (_VMEM_BUDGET // max(int(per_row_bytes), 1)) // 8 * 8)
    tb = min(_MAX_TB, b8, fit)
    # keep >= 2 grid steps when the batch allows it so the 'parallel' batch axis
    # can shard across the two TensorCores on v7x (and pipeline on all gens)
    if b8 >= 16:
        tb = min(tb, max(8, (b8 // 2) // 8 * 8))
    return max(8, tb)


# ----------------------------- in-kernel building blocks ----------------------

def _gather_row(tab, idx):
    """VMEM-resident one-hot (MXU) row gather.  tab: (Np, D) f32, idx: (TB, 1) i32 -> (TB, D)."""
    Np, _ = tab.shape
    TB = idx.shape[0]
    onehot = (idx == lax.broadcasted_iota(jnp.int32, (TB, Np), 1)).astype(jnp.float32)
    return jnp.dot(onehot, tab, preferred_element_type=jnp.float32)


def _gather_rows(tab, idx):
    """tab: (Np, D) f32, idx: (TB, S) i32 -> (TB, S, D) f32 (padded indices gather row 0)."""
    Np, D = tab.shape
    TB, S = idx.shape
    onehot = (idx[:, :, None] ==
              lax.broadcasted_iota(jnp.int32, (TB, S, Np), 2)).astype(jnp.float32)
    out = jnp.dot(onehot.reshape(TB * S, Np), tab, preferred_element_type=jnp.float32)
    return out.reshape(TB, S, D)


def _attention_block(a, ctx, lens, pure, w1a, w1b, b1, w2t, b2):
    """Batched AttentionLayer + attention-weighted aggregation + 'pure' residual.

    a    : (TB, S, D)  rows to attend over (padded rows masked via lens)
    ctx  : (TB, D)     context embedding (broadcast over S inside the kernel)
    lens : (TB, 1)     int32 valid-row counts
    pure : (TB, D)     embedding added after aggregation
    w1a/w1b : (D, H) first Linear split over the concat; b1 (1,H); w2t (1,H); b2 (1,1)
    """
    TB, S, D = a.shape
    H = w1a.shape[1]

    # First Linear: concat([a, ctx]) @ W1 == a @ W1[:D] + ctx @ W1[D:]  (no lane concat).
    h_a = jnp.dot(a.reshape(TB * S, D), w1a,
                  preferred_element_type=jnp.float32).reshape(TB, S, H)
    h_c = jnp.dot(ctx, w1b, preferred_element_type=jnp.float32) + b1        # (TB, H)
    h = jnp.maximum(h_a + h_c[:, None, :], 0.0)                             # ReLU (Dropout p=0)

    # Second Linear -> per-row scores.
    s = jnp.sum(h * w2t, axis=-1) + b2                                      # (TB, S)

    # Masked softmax over the valid rows; mask built in-kernel from lengths.
    valid = lax.broadcasted_iota(jnp.int32, (TB, S), 1) < lens
    s = jnp.where(valid, s, _NEG_BIG)
    m = jnp.max(s, axis=1, keepdims=True)
    e = jnp.exp(s - m)                       # invalid lanes underflow to exactly 0 when lens>=1
    denom = jnp.sum(e, axis=1, keepdims=True)
    wgt = e * pl.reciprocal(jnp.maximum(denom, 1e-20), approx=True)         # (TB, S)

    # Weighted aggregation on the (otherwise idle) MXU instead of VPU mult + sublane reduce.
    agg = jnp.einsum('bqs,bsd->bqd', wgt[:, None, :], a,
                     preferred_element_type=jnp.float32)[:, 0, :]           # (TB, D)
    return agg + pure


def _predict_block(u, it, w1a, w1b, w1c, b1, w2t, b2):
    """sigmoid(PredictLayer(cat(u*it, u, it))); returns a lane-dense (1, TB) row."""
    h = (jnp.dot(u * it, w1a, preferred_element_type=jnp.float32)
         + jnp.dot(u, w1b, preferred_element_type=jnp.float32)
         + jnp.dot(it, w1c, preferred_element_type=jnp.float32)
         + b1)
    h = jnp.maximum(h, 0.0)                                                 # (TB, H)
    # Contract the hidden dim with a transposed-RHS matmul so the scores come out with the
    # batch on lanes -> lane-dense output store (no (TB, 1) masked partial stores).
    s = lax.dot_general(w2t, h, (((1,), (1,)), ((), ())),
                        preferred_element_type=jnp.float32) + b2            # (1, TB)
    # numerically stable, exact sigmoid (approx reciprocal could leave [0, 1])
    z = jnp.exp(-jnp.abs(s))
    r = 1.0 / (1.0 + z)
    return jnp.where(s >= 0.0, r, z * r)


# ----------------------------- fused kernels ----------------------------------

def _usr_fused_kernel(fidx_ref, flen_ref, iidx_ref, uidx_ref,
                      fol_tab, itm_tab, usr_tab,
                      fa_w1a, fa_w1b, fa_b1, fa_w2t, fa_b2,
                      pr_w1a, pr_w1b, pr_w1c, pr_b1, pr_w2t, pr_b2,
                      y_ref):
    fol = fol_tab[...].astype(jnp.float32)
    itm = itm_tab[...].astype(jnp.float32)
    usr = usr_tab[...].astype(jnp.float32)

    item_pure = _gather_row(itm, iidx_ref[...])                 # (TB, D)
    user_emb = _gather_row(usr, uidx_ref[...])                  # (TB, D)
    follow_emb = _gather_rows(fol, fidx_ref[...])               # (TB, F, D)

    item_full = _attention_block(follow_emb, item_pure, flen_ref[...], item_pure,
                                 fa_w1a[...], fa_w1b[...], fa_b1[...], fa_w2t[...], fa_b2[...])
    prob = _predict_block(user_emb, item_full,
                          pr_w1a[...], pr_w1b[...], pr_w1c[...],
                          pr_b1[...], pr_w2t[...], pr_b2[...])  # (1, TB)
    y_ref[...] = prob.reshape(y_ref.shape)


def _grp_fused_kernel(fidx_ref, flen_ref, midx_ref, mlen_ref, iidx_ref, gidx_ref,
                      fol_tab, itm_tab, usr_tab, grp_tab,
                      fa_w1a, fa_w1b, fa_b1, fa_w2t, fa_b2,
                      at_w1a, at_w1b, at_b1, at_w2t, at_b2,
                      pr_w1a, pr_w1b, pr_w1c, pr_b1, pr_w2t, pr_b2,
                      y_ref):
    fol = fol_tab[...].astype(jnp.float32)
    itm = itm_tab[...].astype(jnp.float32)
    usr = usr_tab[...].astype(jnp.float32)
    grp = grp_tab[...].astype(jnp.float32)

    item_pure = _gather_row(itm, iidx_ref[...])                 # (TB, D)
    group_pure = _gather_row(grp, gidx_ref[...])                # (TB, D)
    follow_emb = _gather_rows(fol, fidx_ref[...])               # (TB, F, D)
    member_emb = _gather_rows(usr, midx_ref[...])               # (TB, M, D)

    item_full = _attention_block(follow_emb, item_pure, flen_ref[...], item_pure,
                                 fa_w1a[...], fa_w1b[...], fa_b1[...], fa_w2t[...], fa_b2[...])
    g_embeds = _attention_block(member_emb, item_full, mlen_ref[...], group_pure,
                                at_w1a[...], at_w1b[...], at_b1[...], at_w2t[...], at_b2[...])
    prob = _predict_block(g_embeds, item_full,
                          pr_w1a[...], pr_w1b[...], pr_w1c[...],
                          pr_b1[...], pr_w2t[...], pr_b2[...])  # (1, TB)
    y_ref[...] = prob.reshape(y_ref.shape)


# ----------------------------- spec helpers / wrappers -------------------------

def _row_spec(tb, *rest):
    n = len(rest)
    return pl.BlockSpec((tb,) + tuple(rest), lambda i, _n=n: (i,) + (0,) * _n)


def _const_spec(arr):
    zeros = (0,) * arr.ndim
    return pl.BlockSpec(arr.shape, lambda i, _z=zeros: _z)


def _attn_weights(p):
    return [p['w1a'], p['w1b'], p['b1'], p['w2t'], p['b2']]


def _pred_weights(p):
    return [p['w1a'], p['w1b'], p['w1c'], p['b1'], p['w2t'], p['b2']]


@functools.partial(jax.jit, static_argnames=('tb',))
def _usr_device(params, fidx, flen, item_idx, user_idx, *, tb):
    Bp, F = fidx.shape
    G = Bp // tb
    tabs = [params['follow'], params['item'], params['user']]
    w_args = _attn_weights(params['followAttention']) + _pred_weights(params['predict'])
    y = pl.pallas_call(
        _usr_fused_kernel,
        out_shape=jax.ShapeDtypeStruct((G, 1, tb), jnp.float32),
        grid=(G,),
        in_specs=[_row_spec(tb, F), _row_spec(tb, 1), _row_spec(tb, 1), _row_spec(tb, 1)]
                + [_const_spec(t) for t in tabs]
                + [_const_spec(w) for w in w_args],
        out_specs=pl.BlockSpec((1, 1, tb), lambda i: (i, 0, 0)),
        compiler_params=pltpu.CompilerParams(
            dimension_semantics=("parallel",),
            vmem_limit_bytes=_VMEM_LIMIT),
    )(fidx, flen, item_idx, user_idx, *tabs, *w_args)
    return y.reshape(Bp, 1)


@functools.partial(jax.jit, static_argnames=('tb',))
def _grp_device(params, fidx, flen, midx, mlen, item_idx, group_idx, *, tb):
    Bp, F = fidx.shape
    M = midx.shape[1]
    G = Bp // tb
    tabs = [params['follow'], params['item'], params['user'], params['group']]
    w_args = (_attn_weights(params['followAttention'])
              + _attn_weights(params['attention'])
              + _pred_weights(params['predict']))
    y = pl.pallas_call(
        _grp_fused_kernel,
        out_shape=jax.ShapeDtypeStruct((G, 1, tb), jnp.float32),
        grid=(G,),
        in_specs=[_row_spec(tb, F), _row_spec(tb, 1), _row_spec(tb, M), _row_spec(tb, 1),
                  _row_spec(tb, 1), _row_spec(tb, 1)]
                + [_const_spec(t) for t in tabs]
                + [_const_spec(w) for w in w_args],
        out_specs=pl.BlockSpec((1, 1, tb), lambda i: (i, 0, 0)),
        compiler_params=pltpu.CompilerParams(
            dimension_semantics=("parallel",),
            vmem_limit_bytes=_VMEM_LIMIT),
    )(fidx, flen, midx, mlen, item_idx, group_idx, *tabs, *w_args)
    return y.reshape(Bp, 1)


# ----------------------------- AGREE forward (host glue) -----------------------

def _pad_ragged(lists, num_cols, num_rows):
    idx = np.zeros((num_rows, num_cols), np.int32)
    lens = np.zeros((num_rows, 1), np.int32)
    for b, l in enumerate(lists):
        idx[b, :len(l)] = np.asarray(l, np.int32)
        lens[b, 0] = len(l)
    return jnp.asarray(idx), jnp.asarray(lens)


def _pad_ids(ids, num_rows):
    out = np.zeros((num_rows, 1), np.int32)
    out[:len(ids), 0] = np.asarray(ids, np.int32)
    return jnp.asarray(out)


def usr_forward(params, dicts, user_inputs, item_inputs):
    user_inputs = np.asarray(user_inputs, dtype=np.int32)
    item_inputs = np.asarray(item_inputs, dtype=np.int32)
    B = int(user_inputs.shape[0])

    flists = [dicts['item_follow'][int(i)] for i in item_inputs]
    F = _round_up(max(1, max(len(f) for f in flists)), 8)     # bucketed -> fewer recompiles
    D = params['item'].shape[1]
    tb = _pick_tb(B, _per_row_bytes(D, F, 0, params['follow'].shape[0]))
    Bp = _round_up(B, tb)

    fidx, flen = _pad_ragged(flists, F, Bp)
    y = _usr_device(params, fidx, flen, _pad_ids(item_inputs, Bp),
                    _pad_ids(user_inputs, Bp), tb=tb)
    return y[:B]


def grp_forward(params, dicts, group_inputs, item_inputs):
    group_inputs = np.asarray(group_inputs, dtype=np.int32)
    item_inputs = np.asarray(item_inputs, dtype=np.int32)
    B = int(group_inputs.shape[0])

    flists = [dicts['item_follow'][int(i)] for i in item_inputs]
    F = _round_up(max(1, max(len(f) for f in flists)), 8)
    mlists = [dicts['group_member'][int(g)] for g in group_inputs]
    M = _round_up(max(1, max(len(m) for m in mlists)), 8)

    D = params['item'].shape[1]
    max_rows = max(params['follow'].shape[0], params['user'].shape[0])
    tb = _pick_tb(B, _per_row_bytes(D, F, M, max_rows))
    Bp = _round_up(B, tb)

    fidx, flen = _pad_ragged(flists, F, Bp)
    midx, mlen = _pad_ragged(mlists, M, Bp)
    y = _grp_device(params, fidx, flen, midx, mlen,
                    _pad_ids(item_inputs, Bp), _pad_ids(group_inputs, Bp), tb=tb)
    return y[:B]


def agree_forward(params, dicts, group_inputs, user_inputs, item_inputs):
    if group_inputs is not None and user_inputs is None:
        return grp_forward(params, dicts, group_inputs, item_inputs)
    return usr_forward(params, dicts, user_inputs, item_inputs)


# ----------------------------- parameter init ----------------------------------

def init_params(key, num_users, num_items, num_groups, num_follow, embedding_dim):
    D = embedding_dim
    ks = jax.random.split(key, 16)

    def embedding(k, n, d):
        std = float(np.sqrt(2.0 / (n + d)))                       # torch xavier_normal_
        w = (std * jax.random.normal(k, (n, d))).astype(jnp.float32)
        w = jnp.pad(w, ((0, _round_up(n, 8) - n), (0, 0)))          # sublane-aligned rows
        return w.astype(jnp.bfloat16)                              # bf16 storage: half the DMA bytes

    def linear(kw, kb, fin, fout):
        w = jax.random.normal(kw, (fin, fout), jnp.float32)                   # nn.init.normal_
        bound = 1.0 / float(np.sqrt(fin))
        b = jax.random.uniform(kb, (1, fout), jnp.float32, -bound, bound)     # torch default bias
        return w, b

    def attn_mlp(k0, k1, k2, k3, hidden):
        w1, b1 = linear(k0, k1, 2 * D, hidden)
        w2, b2 = linear(k2, k3, hidden, 1)
        # pre-split first Linear over the concat; second weight stored transposed (1, hidden)
        return dict(w1a=w1[:D], w1b=w1[D:], b1=b1, w2t=w2.T, b2=b2.reshape(1, 1))

    def pred_mlp(k0, k1, k2, k3, hidden):
        w1, b1 = linear(k0, k1, 3 * D, hidden)
        w2, b2 = linear(k2, k3, hidden, 1)
        return dict(w1a=w1[:D], w1b=w1[D:2 * D], w1c=w1[2 * D:],
                    b1=b1, w2t=w2.T, b2=b2.reshape(1, 1))

    return {
        'user':   embedding(ks[0], num_users, D),
        'item':   embedding(ks[1], num_items, D),
        'group':  embedding(ks[2], num_groups, D),
        'follow': embedding(ks[3], num_follow, D),
        'followAttention': attn_mlp(ks[4], ks[5], ks[6], ks[7], 16),
        'attention':       attn_mlp(ks[8], ks[9], ks[10], ks[11], 16),
        'predict':         pred_mlp(ks[12], ks[13], ks[14], ks[15], 8),
    }


# ----------------------------- pure-JAX reference (for a spot check) -----------

def _reference_forward(params, dicts, group_inputs, user_inputs, item_inputs):
    f32 = lambda t: jnp.asarray(t, jnp.float32)
    fol, itm = f32(params['follow']), f32(params['item'])
    usr, grp = f32(params['user']), f32(params['group'])

    def attn(x_rows, ctx, p):                                   # x_rows (S,D), ctx (D,)
        x = jnp.concatenate([x_rows, jnp.broadcast_to(ctx, x_rows.shape)], axis=1)
        w1 = jnp.concatenate([p['w1a'], p['w1b']], axis=0)
        h = jnp.maximum(x @ w1 + p['b1'], 0.0)
        s = (h * p['w2t']).sum(-1) + p['b2'][0, 0]
        w = jax.nn.softmax(s)
        return w @ x_rows

    def item_agg(i):
        follows = dicts['item_follow'][int(i)]
        fe = fol[jnp.asarray(follows)]
        ip = itm[int(i)]
        return attn(fe, ip, params['followAttention']) + ip

    p = params['predict']
    ys = []
    for b in range(len(item_inputs)):
        it = item_agg(item_inputs[b])
        if user_inputs is not None:
            u = usr[int(user_inputs[b])]
        else:
            members = dicts['group_member'][int(group_inputs[b])]
            me = usr[jnp.asarray(members)]
            u = attn(me, it, params['attention']) + grp[int(group_inputs[b])]
        h = jnp.maximum((u * it) @ p['w1a'] + u @ p['w1b'] + it @ p['w1c'] + p['b1'][0], 0.0)
        s = (h * p['w2t'][0]).sum() + p['b2'][0, 0]
        ys.append(jax.nn.sigmoid(s))
    return jnp.stack(ys)[:, None]


# ----------------------------- main ---------------------------------------------

if __name__ == "__main__":
    embedding_dim = 32
    num_users, num_items, num_groups, num_follow = 10, 8, 5, 12
    # drop_ratio = 0.0 -> Dropout is identity; not modeled in-kernel.

    group_member_dict = {0: [0, 1, 2], 1: [3, 4], 2: [5, 6, 7, 8], 3: [1, 9], 4: [2, 3, 4, 5]}
    item_follow_dict = {0: [0, 1], 1: [2, 3, 4], 2: [5], 3: [6, 7, 8],
                        4: [9, 10], 5: [11, 0, 1, 2], 6: [3, 4, 5], 7: [6, 7]}
    dicts = {'group_member': group_member_dict, 'item_follow': item_follow_dict}

    params = init_params(jax.random.PRNGKey(0), num_users, num_items,
                         num_groups, num_follow, embedding_dim)

    item_inputs = np.array([1, 3, 5, 7], dtype=np.int32)
    group_inputs = np.array([0, 2, 4, 1], dtype=np.int32)
    user_inputs = np.array([0, 3, 7, 9], dtype=np.int32)

    # group branch (group_inputs is not None and user_inputs is None -> grp_forward)
    y_grp = agree_forward(params, dicts, group_inputs, None, item_inputs)
    # user branch
    y_usr = agree_forward(params, dicts, None, user_inputs, item_inputs)
    jax.block_until_ready((y_grp, y_usr))

    assert y_grp.shape == (4, 1) and y_usr.shape == (4, 1)
    assert bool(jnp.all(jnp.isfinite(y_grp))) and bool(jnp.all(jnp.isfinite(y_usr)))

    # Spot-check against a pure-JAX reference using the same bf16-rounded tables; the loose
    # tolerance covers the approx softmax reciprocal and split-matmul accumulation order.
    ref_grp = _reference_forward(params, dicts, group_inputs, None, item_inputs)
    ref_usr = _reference_forward(params, dicts, None, user_inputs, item_inputs)
    err = max(float(jnp.max(jnp.abs(y_grp - ref_grp))),
              float(jnp.max(jnp.abs(y_usr - ref_usr))))
    assert err < 5e-3, f"kernel vs reference mismatch (max abs err = {err})"

    print("KERNEL_OK")
</pallas_src>

<mosaic_0001>
module attributes {stable_mosaic.version = 11 : i64} {
  func.func @_grp_fused_kernel(%arg0: i32, %arg1: memref<8x8xi32, #tpu.memory_space<vmem>>, %arg2: memref<8x1xi32, #tpu.memory_space<vmem>>, %arg3: memref<8x8xi32, #tpu.memory_space<vmem>>, %arg4: memref<8x1xi32, #tpu.memory_space<vmem>>, %arg5: memref<8x1xi32, #tpu.memory_space<vmem>>, %arg6: memref<8x1xi32, #tpu.memory_space<vmem>>, %arg7: memref<16x32xbf16, #tpu.memory_space<vmem>>, %arg8: memref<8x32xbf16, #tpu.memory_space<vmem>>, %arg9: memref<16x32xbf16, #tpu.memory_space<vmem>>, %arg10: memref<8x32xbf16, #tpu.memory_space<vmem>>, %arg11: memref<32x16xf32, #tpu.memory_space<vmem>>, %arg12: memref<32x16xf32, #tpu.memory_space<vmem>>, %arg13: memref<1x16xf32, #tpu.memory_space<vmem>>, %arg14: memref<1x16xf32, #tpu.memory_space<vmem>>, %arg15: memref<1x1xf32, #tpu.memory_space<vmem>>, %arg16: memref<32x16xf32, #tpu.memory_space<vmem>>, %arg17: memref<32x16xf32, #tpu.memory_space<vmem>>, %arg18: memref<1x16xf32, #tpu.memory_space<vmem>>, %arg19: memref<1x16xf32, #tpu.memory_space<vmem>>, %arg20: memref<1x1xf32, #tpu.memory_space<vmem>>, %arg21: memref<32x8xf32, #tpu.memory_space<vmem>>, %arg22: memref<32x8xf32, #tpu.memory_space<vmem>>, %arg23: memref<32x8xf32, #tpu.memory_space<vmem>>, %arg24: memref<1x8xf32, #tpu.memory_space<vmem>>, %arg25: memref<1x8xf32, #tpu.memory_space<vmem>>, %arg26: memref<1x1xf32, #tpu.memory_space<vmem>>, %arg27: memref<1x1x8xf32, #tpu.memory_space<vmem>>) attributes {dimension_semantics = [#tpu.dimension_semantics<parallel>], iteration_bounds = array<i64: 1>, scalar_prefetch = 0 : i64, scratch_operands = 0 : i64, tpu.core_type = #tpu.core_type<tc>, window_params = [{transform_indices = @transform_0, window_bounds = array<i64: 8, 8>}, {transform_indices = @transform_1, window_bounds = array<i64: 8, 1>}, {transform_indices = @transform_2, window_bounds = array<i64: 8, 8>}, {transform_indices = @transform_3, window_bounds = array<i64: 8, 1>}, {transform_indices = @transform_4, window_bounds = array<i64: 8, 1>}, {transform_indices = @transform_5, window_bounds = array<i64: 8, 1>}, {pipeline_mode = #tpu.pipeline_mode<synchronous>, transform_indices = @transform_6, window_bounds = array<i64: 16, 32>}, {pipeline_mode = #tpu.pipeline_mode<synchronous>, transform_indices = @transform_7, window_bounds = array<i64: 8, 32>}, {pipeline_mode = #tpu.pipeline_mode<synchronous>, transform_indices = @transform_8, window_bounds = array<i64: 16, 32>}, {pipeline_mode = #tpu.pipeline_mode<synchronous>, transform_indices = @transform_9, window_bounds = array<i64: 8, 32>}, {pipeline_mode = #tpu.pipeline_mode<synchronous>, transform_indices = @transform_10, window_bounds = array<i64: 32, 16>}, {pipeline_mode = #tpu.pipeline_mode<synchronous>, transform_indices = @transform_11, window_bounds = array<i64: 32, 16>}, {pipeline_mode = #tpu.pipeline_mode<synchronous>, transform_indices = @transform_12, window_bounds = array<i64: 1, 16>}, {pipeline_mode = #tpu.pipeline_mode<synchronous>, transform_indices = @transform_13, window_bounds = array<i64: 1, 16>}, {pipeline_mode = #tpu.pipeline_mode<synchronous>, transform_indices = @transform_14, window_bounds = array<i64: 1, 1>}, {pipeline_mode = #tpu.pipeline_mode<synchronous>, transform_indices = @transform_15, window_bounds = array<i64: 32, 16>}, {pipeline_mode = #tpu.pipeline_mode<synchronous>, transform_indices = @transform_16, window_bounds = array<i64: 32, 16>}, {pipeline_mode = #tpu.pipeline_mode<synchronous>, transform_indices = @transform_17, window_bounds = array<i64: 1, 16>}, {pipeline_mode = #tpu.pipeline_mode<synchronous>, transform_indices = @transform_18, window_bounds = array<i64: 1, 16>}, {pipeline_mode = #tpu.pipeline_mode<synchronous>, transform_indices = @transform_19, window_bounds = array<i64: 1, 1>}, {pipeline_mode = #tpu.pipeline_mode<synchronous>, transform_indices = @transform_20, window_bounds = array<i64: 32, 8>}, {pipeline_mode = #tpu.pipeline_mode<synchronous>, transform_indices = @transform_21, window_bounds = array<i64: 32, 8>}, {pipeline_mode = #tpu.pipeline_mode<synchronous>, transform_indices = @transform_22, window_bounds = array<i64: 32, 8>}, {pipeline_mode = #tpu.pipeline_mode<synchronous>, transform_indices = @transform_23, window_bounds = array<i64: 1, 8>}, {pipeline_mode = #tpu.pipeline_mode<synchronous>, transform_indices = @transform_24, window_bounds = array<i64: 1, 8>}, {pipeline_mode = #tpu.pipeline_mode<synchronous>, transform_indices = @transform_25, window_bounds = array<i64: 1, 1>}, {transform_indices = @transform_26, window_bounds = array<i64: 1, 1, 8>}]} {
    %c0 = arith.constant 0 : index
    %c0_0 = arith.constant 0 : index
    %0 = vector.load %arg7[%c0, %c0_0] : memref<16x32xbf16, #tpu.memory_space<vmem>>, vector<16x32xbf16>
    %1 = arith.extf %0 : vector<16x32xbf16> to vector<16x32xf32>
    %c0_1 = arith.constant 0 : index
    %c0_2 = arith.constant 0 : index
    %2 = vector.load %arg8[%c0_1, %c0_2] : memref<8x32xbf16, #tpu.memory_space<vmem>>, vector<8x32xbf16>
    %3 = arith.extf %2 : vector<8x32xbf16> to vector<8x32xf32>
    %c0_3 = arith.constant 0 : index
    %c0_4 = arith.constant 0 : index
    %4 = vector.load %arg9[%c0_3, %c0_4] : memref<16x32xbf16, #tpu.memory_space<vmem>>, vector<16x32xbf16>
    %5 = arith.extf %4 : vector<16x32xbf16> to vector<16x32xf32>
    %c0_5 = arith.constant 0 : index
    %c0_6 = arith.constant 0 : index
    %6 = vector.load %arg10[%c0_5, %c0_6] : memref<8x32xbf16, #tpu.memory_space<vmem>>, vector<8x32xbf16>
    %7 = arith.extf %6 : vector<8x32xbf16> to vector<8x32xf32>
    %c0_7 = arith.constant 0 : index
    %c0_8 = arith.constant 0 : index
    %8 = vector.load %arg5[%c0_7, %c0_8] : memref<8x1xi32, #tpu.memory_space<vmem>>, vector<8x1xi32>
    %9 = tpu.iota {dimensions = array<i32: 1>} : vector<8x8xi32>
    %10 = vector.broadcast %8 : vector<8x1xi32> to vector<8x8xi32>
    %11 = arith.cmpi eq, %10, %9 : vector<8x8xi32>
    %12 = arith.extui %11 : vector<8x8xi1> to vector<8x8xi32>
    %13 = arith.sitofp %12 : vector<8x8xi32> to vector<8x8xf32>
    %cst = arith.constant dense<0.000000e+00> : vector<8x32xf32>
    %14 = tpu.matmul %13, %3, %cst {dimension_numbers = #tpu.dot_dimension_numbers<[1], [0], [0], [1], [0, 0, 1, 1], [], []>} : vector<8x8xf32>, vector<8x32xf32>, vector<8x32xf32> -> vector<8x32xf32>
    %c0_9 = arith.constant 0 : index
    %c0_10 = arith.constant 0 : index
    %15 = vector.load %arg6[%c0_9, %c0_10] : memref<8x1xi32, #tpu.memory_space<vmem>>, vector<8x1xi32>
    %16 = tpu.iota {dimensions = array<i32: 1>} : vector<8x8xi32>
    %17 = vector.broadcast %15 : vector<8x1xi32> to vector<8x8xi32>
    %18 = arith.cmpi eq, %17, %16 : vector<8x8xi32>
    %19 = arith.extui %18 : vector<8x8xi1> to vector<8x8xi32>
    %20 = arith.sitofp %19 : vector<8x8xi32> to vector<8x8xf32>
    %cst_11 = arith.constant dense<0.000000e+00> : vector<8x32xf32>
    %21 = tpu.matmul %20, %7, %cst_11 {dimension_numbers = #tpu.dot_dimension_numbers<[1], [0], [0], [1], [0, 0, 1, 1], [], []>} : vector<8x8xf32>, vector<8x32xf32>, vector<8x32xf32> -> vector<8x32xf32>
    %c0_12 = arith.constant 0 : index
    %c0_13 = arith.constant 0 : index
    %22 = vector.load %arg1[%c0_12, %c0_13] : memref<8x8xi32, #tpu.memory_space<vmem>>, vector<8x8xi32>
    %23 = vector.shape_cast %22 : vector<8x8xi32> to vector<8x8x1xi32>
    %24 = tpu.iota {dimensions = array<i32: 2>} : vector<8x8x16xi32>
    %25 = vector.broadcast %23 : vector<8x8x1xi32> to vector<8x8x16xi32>
    %26 = arith.cmpi eq, %25, %24 : vector<8x8x16xi32>
    %27 = arith.extui %26 : vector<8x8x16xi1> to vector<8x8x16xi32>
    %28 = arith.sitofp %27 : vector<8x8x16xi32> to vector<8x8x16xf32>
    %29 = vector.shape_cast %28 : vector<8x8x16xf32> to vector<64x16xf32>
    %cst_14 = arith.constant dense<0.000000e+00> : vector<64x32xf32>
    %30 = tpu.matmul %29, %1, %cst_14 {dimension_numbers = #tpu.dot_dimension_numbers<[1], [0], [0], [1], [0, 0, 1, 1], [], []>} : vector<64x16xf32>, vector<16x32xf32>, vector<64x32xf32> -> vector<64x32xf32>
    %31 = vector.shape_cast %30 : vector<64x32xf32> to vector<8x8x32xf32>
    %c0_15 = arith.constant 0 : index
    %c0_16 = arith.constant 0 : index
    %32 = vector.load %arg3[%c0_15, %c0_16] : memref<8x8xi32, #tpu.memory_space<vmem>>, vector<8x8xi32>
    %33 = vector.shape_cast %32 : vector<8x8xi32> to vector<8x8x1xi32>
    %34 = tpu.iota {dimensions = array<i32: 2>} : vector<8x8x16xi32>
    %35 = vector.broadcast %33 : vector<8x8x1xi32> to vector<8x8x16xi32>
    %36 = arith.cmpi eq, %35, %34 : vector<8x8x16xi32>
    %37 = arith.extui %36 : vector<8x8x16xi1> to vector<8x8x16xi32>
    %38 = arith.sitofp %37 : vector<8x8x16xi32> to vector<8x8x16xf32>
    %39 = vector.shape_cast %38 : vector<8x8x16xf32> to vector<64x16xf32>
    %cst_17 = arith.constant dense<0.000000e+00> : vector<64x32xf32>
    %40 = tpu.matmul %39, %5, %cst_17 {dimension_numbers = #tpu.dot_dimension_numbers<[1], [0], [0], [1], [0, 0, 1, 1], [], []>} : vector<64x16xf32>, vector<16x32xf32>, vector<64x32xf32> -> vector<64x32xf32>
    %41 = vector.shape_cast %40 : vector<64x32xf32> to vector<8x8x32xf32>
    %c0_18 = arith.constant 0 : index
    %c0_19 = arith.constant 0 : index
    %42 = vector.load %arg2[%c0_18, %c0_19] : memref<8x1xi32, #tpu.memory_space<vmem>>, vector<8x1xi32>
    %c0_20 = arith.constant 0 : index
    %c0_21 = arith.constant 0 : index
    %43 = vector.load %arg11[%c0_20, %c0_21] : memref<32x16xf32, #tpu.memory_space<vmem>>, vector<32x16xf32>
    %c0_22 = arith.constant 0 : index
    %c0_23 = arith.constant 0 : index
    %44 = vector.load %arg12[%c0_22, %c0_23] : memref<32x16xf32, #tpu.memory_space<vmem>>, vector<32x16xf32>
    %c0_24 = arith.constant 0 : index
    %c0_25 = arith.constant 0 : index
    %45 = vector.load %arg13[%c0_24, %c0_25] : memref<1x16xf32, #tpu.memory_space<vmem>>, vector<1x16xf32>
    %c0_26 = arith.constant 0 : index
    %c0_27 = arith.constant 0 : index
    %46 = vector.load %arg14[%c0_26, %c0_27] : memref<1x16xf32, #tpu.memory_space<vmem>>, vector<1x16xf32>
    %c0_28 = arith.constant 0 : index
    %c0_29 = arith.constant 0 : index
    %47 = vector.load %arg15[%c0_28, %c0_29] : memref<1x1xf32, #tpu.memory_space<vmem>>, vector<1x1xf32>
    %48 = vector.shape_cast %31 : vector<8x8x32xf32> to vector<64x32xf32>
    %cst_30 = arith.constant dense<0.000000e+00> : vector<64x16xf32>
    %49 = tpu.matmul %48, %43, %cst_30 {dimension_numbers = #tpu.dot_dimension_numbers<[1], [0], [0], [1], [0, 0, 1, 1], [], []>} : vector<64x32xf32>, vector<32x16xf32>, vector<64x16xf32> -> vector<64x16xf32>
    %50 = vector.shape_cast %49 : vector<64x16xf32> to vector<8x8x16xf32>
    %cst_31 = arith.constant dense<0.000000e+00> : vector<8x16xf32>
    %51 = tpu.matmul %14, %44, %cst_31 {dimension_numbers = #tpu.dot_dimension_numbers<[1], [0], [0], [1], [0, 0, 1, 1], [], []>} : vector<8x32xf32>, vector<32x16xf32>, vector<8x16xf32> -> vector<8x16xf32>
    %52 = vector.broadcast %45 : vector<1x16xf32> to vector<8x16xf32>
    %53 = arith.addf %51, %52 : vector<8x16xf32>
    %54 = vector.shape_cast %53 : vector<8x16xf32> to vector<8x1x16xf32>
    %55 = vector.broadcast %54 : vector<8x1x16xf32> to vector<8x8x16xf32>
    %56 = arith.addf %50, %55 : vector<8x8x16xf32>
    %cst_32 = arith.constant 0.000000e+00 : f32
    %57 = vector.broadcast %cst_32 : f32 to vector<8x8x16xf32>
    %58 = arith.maximumf %56, %57 : vector<8x8x16xf32>
    %59 = vector.shape_cast %46 : vector<1x16xf32> to vector<1x1x16xf32>
    %60 = vector.broadcast %59 : vector<1x1x16xf32> to vector<8x8x16xf32>
    %61 = arith.mulf %58, %60 : vector<8x8x16xf32>
    %cst_33 = arith.constant dense<0.000000e+00> : vector<8x8xf32>
    %62 = vector.multi_reduction <add>, %61, %cst_33 [2] : vector<8x8x16xf32> to vector<8x8xf32>
    %63 = vector.broadcast %47 : vector<1x1xf32> to vector<8x8xf32>
    %64 = arith.addf %62, %63 : vector<8x8xf32>
    %65 = tpu.iota {dimensions = array<i32: 1>} : vector<8x8xi32>
    %66 = vector.broadcast %42 : vector<8x1xi32> to vector<8x8xi32>
    %67 = arith.cmpi slt, %65, %66 : vector<8x8xi32>
    %cst_34 = arith.constant -1.000000e+30 : f32
    %68 = vector.broadcast %cst_34 : f32 to vector<8x8xf32>
    %69 = arith.select %67, %64, %68 : vector<8x8xi1>, vector<8x8xf32>
    %cst_35 = arith.constant dense<0xFF800000> : vector<8xf32>
    %70 = vector.multi_reduction <maximumf>, %69, %cst_35 [1] : vector<8x8xf32> to vector<8xf32>
    %71 = vector.shape_cast %70 : vector<8xf32> to vector<8x1xf32>
    %72 = vector.broadcast %71 : vector<8x1xf32> to vector<8x8xf32>
    %73 = arith.subf %69, %72 : vector<8x8xf32>
    %74 = math.exp %73 : vector<8x8xf32>
    %cst_36 = arith.constant dense<0.000000e+00> : vector<8xf32>
    %75 = vector.multi_reduction <add>, %74, %cst_36 [1] : vector<8x8xf32> to vector<8xf32>
    %76 = vector.shape_cast %75 : vector<8xf32> to vector<8x1xf32>
    %cst_37 = arith.constant 9.99999968E-21 : f32
    %77 = vector.broadcast %cst_37 : f32 to vector<8x1xf32>
    %78 = arith.maximumf %76, %77 : vector<8x1xf32>
    %79 = tpu.reciprocal %78 {approx = true} : vector<8x1xf32> -> vector<8x1xf32>
    %80 = vector.broadcast %79 : vector<8x1xf32> to vector<8x8xf32>
    %81 = arith.mulf %74, %80 : vector<8x8xf32>
    %82 = vector.shape_cast %81 : vector<8x8xf32> to vector<8x1x8xf32>
    "tpu.trace_start"() <{level = 10 : i32, message = "bqs,bsd->bqd"}> : () -> ()
    %cst_38 = arith.constant dense<0.000000e+00> : vector<8x1x32xf32>
    %83 = tpu.matmul %82, %31, %cst_38 {dimension_numbers = #tpu.dot_dimension_numbers<[2], [1], [1], [2], [0, 0, 0, 1, 1, 2], [0], [0]>} : vector<8x1x8xf32>, vector<8x8x32xf32>, vector<8x1x32xf32> -> vector<8x1x32xf32>
    "tpu.trace_stop"() : () -> ()
    %84 = vector.shape_cast %83 : vector<8x1x32xf32> to vector<8x32xf32>
    %85 = arith.addf %84, %14 : vector<8x32xf32>
    %c0_39 = arith.constant 0 : index
    %c0_40 = arith.constant 0 : index
    %86 = vector.load %arg4[%c0_39, %c0_40] : memref<8x1xi32, #tpu.memory_space<vmem>>, vector<8x1xi32>
    %c0_41 = arith.constant 0 : index
    %c0_42 = arith.constant 0 : index
    %87 = vector.load %arg16[%c0_41, %c0_42] : memref<32x16xf32, #tpu.memory_space<vmem>>, vector<32x16xf32>
    %c0_43 = arith.constant 0 : index
    %c0_44 = arith.constant 0 : index
    %88 = vector.load %arg17[%c0_43, %c0_44] : memref<32x16xf32, #tpu.memory_space<vmem>>, vector<32x16xf32>
    %c0_45 = arith.constant 0 : index
    %c0_46 = arith.constant 0 : index
    %89 = vector.load %arg18[%c0_45, %c0_46] : memref<1x16xf32, #tpu.memory_space<vmem>>, vector<1x16xf32>
    %c0_47 = arith.constant 0 : index
    %c0_48 = arith.constant 0 : index
    %90 = vector.load %arg19[%c0_47, %c0_48] : memref<1x16xf32, #tpu.memory_space<vmem>>, vector<1x16xf32>
    %c0_49 = arith.constant 0 : index
    %c0_50 = arith.constant 0 : index
    %91 = vector.load %arg20[%c0_49, %c0_50] : memref<1x1xf32, #tpu.memory_space<vmem>>, vector<1x1xf32>
    %92 = vector.shape_cast %41 : vector<8x8x32xf32> to vector<64x32xf32>
    %cst_51 = arith.constant dense<0.000000e+00> : vector<64x16xf32>
    %93 = tpu.matmul %92, %87, %cst_51 {dimension_numbers = #tpu.dot_dimension_numbers<[1], [0], [0], [1], [0, 0, 1, 1], [], []>} : vector<64x32xf32>, vector<32x16xf32>, vector<64x16xf32> -> vector<64x16xf32>
    %94 = vector.shape_cast %93 : vector<64x16xf32> to vector<8x8x16xf32>
    %cst_52 = arith.constant dense<0.000000e+00> : vector<8x16xf32>
    %95 = tpu.matmul %85, %88, %cst_52 {dimension_numbers = #tpu.dot_dimension_numbers<[1], [0], [0], [1], [0, 0, 1, 1], [], []>} : vector<8x32xf32>, vector<32x16xf32>, vector<8x16xf32> -> vector<8x16xf32>
    %96 = vector.broadcast %89 : vector<1x16xf32> to vector<8x16xf32>
    %97 = arith.addf %95, %96 : vector<8x16xf32>
    %98 = vector.shape_cast %97 : vector<8x16xf32> to vector<8x1x16xf32>
    %99 = vector.broadcast %98 : vector<8x1x16xf32> to vector<8x8x16xf32>
    %100 = arith.addf %94, %99 : vector<8x8x16xf32>
    %cst_53 = arith.constant 0.000000e+00 : f32
    %101 = vector.broadcast %cst_53 : f32 to vector<8x8x16xf32>
    %102 = arith.maximumf %100, %101 : vector<8x8x16xf32>
    %103 = vector.shape_cast %90 : vector<1x16xf32> to vector<1x1x16xf32>
    %104 = vector.broadcast %103 : vector<1x1x16xf32> to vector<8x8x16xf32>
    %105 = arith.mulf %102, %104 : vector<8x8x16xf32>
    %cst_54 = arith.constant dense<0.000000e+00> : vector<8x8xf32>
    %106 = vector.multi_reduction <add>, %105, %cst_54 [2] : vector<8x8x16xf32> to vector<8x8xf32>
    %107 = vector.broadcast %91 : vector<1x1xf32> to vector<8x8xf32>
    %108 = arith.addf %106, %107 : vector<8x8xf32>
    %109 = tpu.iota {dimensions = array<i32: 1>} : vector<8x8xi32>
    %110 = vector.broadcast %86 : vector<8x1xi32> to vector<8x8xi32>
    %111 = arith.cmpi slt, %109, %110 : vector<8x8xi32>
    %cst_55 = arith.constant -1.000000e+30 : f32
    %112 = vector.broadcast %cst_55 : f32 to vector<8x8xf32>
    %113 = arith.select %111, %108, %112 : vector<8x8xi1>, vector<8x8xf32>
    %cst_56 = arith.constant dense<0xFF800000> : vector<8xf32>
    %114 = vector.multi_reduction <maximumf>, %113, %cst_56 [1] : vector<8x8xf32> to vector<8xf32>
    %115 = vector.shape_cast %114 : vector<8xf32> to vector<8x1xf32>
    %116 = vector.broadcast %115 : vector<8x1xf32> to vector<8x8xf32>
    %117 = arith.subf %113, %116 : vector<8x8xf32>
    %118 = math.exp %117 : vector<8x8xf32>
    %cst_57 = arith.constant dense<0.000000e+00> : vector<8xf32>
    %119 = vector.multi_reduction <add>, %118, %cst_57 [1] : vector<8x8xf32> to vector<8xf32>
    %120 = vector.shape_cast %119 : vector<8xf32> to vector<8x1xf32>
    %cst_58 = arith.constant 9.99999968E-21 : f32
    %121 = vector.broadcast %cst_58 : f32 to vector<8x1xf32>
    %122 = arith.maximumf %120, %121 : vector<8x1xf32>
    %123 = tpu.reciprocal %122 {approx = true} : vector<8x1xf32> -> vector<8x1xf32>
    %124 = vector.broadcast %123 : vector<8x1xf32> to vector<8x8xf32>
    %125 = arith.mulf %118, %124 : vector<8x8xf32>
    %126 = vector.shape_cast %125 : vector<8x8xf32> to vector<8x1x8xf32>
    "tpu.trace_start"() <{level = 10 : i32, message = "bqs,bsd->bqd"}> : () -> ()
    %cst_59 = arith.constant dense<0.000000e+00> : vector<8x1x32xf32>
    %127 = tpu.matmul %126, %41, %cst_59 {dimension_numbers = #tpu.dot_dimension_numbers<[2], [1], [1], [2], [0, 0, 0, 1, 1, 2], [0], [0]>} : vector<8x1x8xf32>, vector<8x8x32xf32>, vector<8x1x32xf32> -> vector<8x1x32xf32>
    "tpu.trace_stop"() : () -> ()
    %128 = vector.shape_cast %127 : vector<8x1x32xf32> to vector<8x32xf32>
    %129 = arith.addf %128, %21 : vector<8x32xf32>
    %c0_60 = arith.constant 0 : index
    %c0_61 = arith.constant 0 : index
    %130 = vector.load %arg21[%c0_60, %c0_61] : memref<32x8xf32, #tpu.memory_space<vmem>>, vector<32x8xf32>
    %c0_62 = arith.constant 0 : index
    %c0_63 = arith.constant 0 : index
    %131 = vector.load %arg22[%c0_62, %c0_63] : memref<32x8xf32, #tpu.memory_space<vmem>>, vector<32x8xf32>
    %c0_64 = arith.constant 0 : index
    %c0_65 = arith.constant 0 : index
    %132 = vector.load %arg23[%c0_64, %c0_65] : memref<32x8xf32, #tpu.memory_space<vmem>>, vector<32x8xf32>
    %c0_66 = arith.constant 0 : index
    %c0_67 = arith.constant 0 : index
    %133 = vector.load %arg24[%c0_66, %c0_67] : memref<1x8xf32, #tpu.memory_space<vmem>>, vector<1x8xf32>
    %c0_68 = arith.constant 0 : index
    %c0_69 = arith.constant 0 : index
    %134 = vector.load %arg25[%c0_68, %c0_69] : memref<1x8xf32, #tpu.memory_space<vmem>>, vector<1x8xf32>
    %c0_70 = arith.constant 0 : index
    %c0_71 = arith.constant 0 : index
    %135 = vector.load %arg26[%c0_70, %c0_71] : memref<1x1xf32, #tpu.memory_space<vmem>>, vector<1x1xf32>
    %136 = arith.mulf %129, %85 : vector<8x32xf32>
    %cst_72 = arith.constant dense<0.000000e+00> : vector<8x8xf32>
    %137 = tpu.matmul %136, %130, %cst_72 {dimension_numbers = #tpu.dot_dimension_numbers<[1], [0], [0], [1], [0, 0, 1, 1], [], []>} : vector<8x32xf32>, vector<32x8xf32>, vector<8x8xf32> -> vector<8x8xf32>
    %cst_73 = arith.constant dense<0.000000e+00> : vector<8x8xf32>
    %138 = tpu.matmul %129, %131, %cst_73 {dimension_numbers = #tpu.dot_dimension_numbers<[1], [0], [0], [1], [0, 0, 1, 1], [], []>} : vector<8x32xf32>, vector<32x8xf32>, vector<8x8xf32> -> vector<8x8xf32>
    %139 = arith.addf %137, %138 : vector<8x8xf32>
    %cst_74 = arith.constant dense<0.000000e+00> : vector<8x8xf32>
    %140 = tpu.matmul %85, %132, %cst_74 {dimension_numbers = #tpu.dot_dimension_numbers<[1], [0], [0], [1], [0, 0, 1, 1], [], []>} : vector<8x32xf32>, vector<32x8xf32>, vector<8x8xf32> -> vector<8x8xf32>
    %141 = arith.addf %139, %140 : vector<8x8xf32>
    %142 = vector.broadcast %133 : vector<1x8xf32> to vector<8x8xf32>
    %143 = arith.addf %141, %142 : vector<8x8xf32>
    %cst_75 = arith.constant 0.000000e+00 : f32
    %144 = vector.broadcast %cst_75 : f32 to vector<8x8xf32>
    %145 = arith.maximumf %143, %144 : vector<8x8xf32>
    %cst_76 = arith.constant dense<0.000000e+00> : vector<1x8xf32>
    %146 = tpu.matmul %134, %145, %cst_76 {dimension_numbers = #tpu.dot_dimension_numbers<[1], [1], [0], [0], [0, 0, 1, 0], [], []>} : vector<1x8xf32>, vector<8x8xf32>, vector<1x8xf32> -> vector<1x8xf32>
    %147 = vector.broadcast %135 : vector<1x1xf32> to vector<1x8xf32>
    %148 = arith.addf %146, %147 : vector<1x8xf32>
    %149 = math.absf %148 : vector<1x8xf32>
    %cst_77 = arith.constant 0.000000e+00 : f32
    %150 = vector.broadcast %cst_77 : f32 to vector<1x8xf32>
    %151 = arith.subf %150, %149 : vector<1x8xf32>
    %152 = math.exp %151 : vector<1x8xf32>
    %cst_78 = arith.constant 1.000000e+00 : f32
    %153 = vector.broadcast %cst_78 : f32 to vector<1x8xf32>
    %154 = arith.addf %153, %152 : vector<1x8xf32>
    %cst_79 = arith.constant 1.000000e+00 : f32
    %155 = vector.broadcast %cst_79 : f32 to vector<1x8xf32>
    %156 = arith.divf %155, %154 : vector<1x8xf32>
    %cst_80 = arith.constant 0.000000e+00 : f32
    %157 = vector.broadcast %cst_80 : f32 to vector<1x8xf32>
    %158 = arith.cmpf oge, %148, %157 : vector<1x8xf32>
    %159 = arith.mulf %152, %156 : vector<1x8xf32>
    %160 = arith.select %158, %156, %159 : vector<1x8xi1>, vector<1x8xf32>
    %161 = vector.shape_cast %160 : vector<1x8xf32> to vector<1x1x8xf32>
    %c0_81 = arith.constant 0 : index
    %c0_82 = arith.constant 0 : index
    %c0_83 = arith.constant 0 : index
    %162 = vector.load %arg27[%c0_81, %c0_82, %c0_83] : memref<1x1x8xf32, #tpu.memory_space<vmem>>, vector<1x1x8xf32>
    tpu.vector_store %arg27[%c0_81, %c0_82, %c0_83], %161 {strides = array<i32>} : memref<1x1x8xf32, #tpu.memory_space<vmem>>, vector<1x1x8xf32>,
    return
  }
  func.func @transform_0(%arg0: i32) -> (i32, i32) {
    %c0_i32 = arith.constant 0 : i32
    %c0_i32_0 = arith.constant 0 : i32
    return %arg0, %c0_i32 : i32, i32
  }
  func.func @transform_1(%arg0: i32) -> (i32, i32) {
    %c0_i32 = arith.constant 0 : i32
    %c0_i32_0 = arith.constant 0 : i32
    return %arg0, %c0_i32 : i32, i32
  }
  func.func @transform_2(%arg0: i32) -> (i32, i32) {
    %c0_i32 = arith.constant 0 : i32
    %c0_i32_0 = arith.constant 0 : i32
    return %arg0, %c0_i32 : i32, i32
  }
  func.func @transform_3(%arg0: i32) -> (i32, i32) {
    %c0_i32 = arith.constant 0 : i32
    %c0_i32_0 = arith.constant 0 : i32
    return %arg0, %c0_i32 : i32, i32
  }
  func.func @transform_4(%arg0: i32) -> (i32, i32) {
    %c0_i32 = arith.constant 0 : i32
    %c0_i32_0 = arith.constant 0 : i32
    return %arg0, %c0_i32 : i32, i32
  }
  func.func @transform_5(%arg0: i32) -> (i32, i32) {
    %c0_i32 = arith.constant 0 : i32
    %c0_i32_0 = arith.constant 0 : i32
    return %arg0, %c0_i32 : i32, i32
  }
  func.func @transform_6(%arg0: i32) -> (i32, i32) {
    %c0_i32 = arith.constant 0 : i32
    %c0_i32_0 = arith.constant 0 : i32
    %c0_i32_1 = arith.constant 0 : i32
    return %c0_i32, %c0_i32_0 : i32, i32
  }
  func.func @transform_7(%arg0: i32) -> (i32, i32) {
    %c0_i32 = arith.constant 0 : i32
    %c0_i32_0 = arith.constant 0 : i32
    %c0_i32_1 = arith.constant 0 : i32
    return %c0_i32, %c0_i32_0 : i32, i32
  }
  func.func @transform_8(%arg0: i32) -> (i32, i32) {
    %c0_i32 = arith.constant 0 : i32
    %c0_i32_0 = arith.constant 0 : i32
    %c0_i32_1 = arith.constant 0 : i32
    return %c0_i32, %c0_i32_0 : i32, i32
  }
  func.func @transform_9(%arg0: i32) -> (i32, i32) {
    %c0_i32 = arith.constant 0 : i32
    %c0_i32_0 = arith.constant 0 : i32
    %c0_i32_1 = arith.constant 0 : i32
    return %c0_i32, %c0_i32_0 : i32, i32
  }
  func.func @transform_10(%arg0: i32) -> (i32, i32) {
    %c0_i32 = arith.constant 0 : i32
    %c0_i32_0 = arith.constant 0 : i32
    %c0_i32_1 = arith.constant 0 : i32
    return %c0_i32, %c0_i32_0 : i32, i32
  }
  func.func @transform_11(%arg0: i32) -> (i32, i32) {
    %c0_i32 = arith.constant 0 : i32
    %c0_i32_0 = arith.constant 0 : i32
    %c0_i32_1 = arith.constant 0 : i32
    return %c0_i32, %c0_i32_0 : i32, i32
  }
  func.func @transform_12(%arg0: i32) -> (i32, i32) {
    %c0_i32 = arith.constant 0 : i32
    %c0_i32_0 = arith.constant 0 : i32
    %c0_i32_1 = arith.constant 0 : i32
    return %c0_i32, %c0_i32_0 : i32, i32
  }
  func.func @transform_13(%arg0: i32) -> (i32, i32) {
    %c0_i32 = arith.constant 0 : i32
    %c0_i32_0 = arith.constant 0 : i32
    %c0_i32_1 = arith.constant 0 : i32
    return %c0_i32, %c0_i32_0 : i32, i32
  }
  func.func @transform_14(%arg0: i32) -> (i32, i32) {
    %c0_i32 = arith.constant 0 : i32
    %c0_i32_0 = arith.constant 0 : i32
    %c0_i32_1 = arith.constant 0 : i32
    return %c0_i32, %c0_i32_0 : i32, i32
  }
  func.func @transform_15(%arg0: i32) -> (i32, i32) {
    %c0_i32 = arith.constant 0 : i32
    %c0_i32_0 = arith.constant 0 : i32
    %c0_i32_1 = arith.constant 0 : i32
    return %c0_i32, %c0_i32_0 : i32, i32
  }
  func.func @transform_16(%arg0: i32) -> (i32, i32) {
    %c0_i32 = arith.constant 0 : i32
    %c0_i32_0 = arith.constant 0 : i32
    %c0_i32_1 = arith.constant 0 : i32
    return %c0_i32, %c0_i32_0 : i32, i32
  }
  func.func @transform_17(%arg0: i32) -> (i32, i32) {
    %c0_i32 = arith.constant 0 : i32
    %c0_i32_0 = arith.constant 0 : i32
    %c0_i32_1 = arith.constant 0 : i32
    return %c0_i32, %c0_i32_0 : i32, i32
  }
  func.func @transform_18(%arg0: i32) -> (i32, i32) {
    %c0_i32 = arith.constant 0 : i32
    %c0_i32_0 = arith.constant 0 : i32
    %c0_i32_1 = arith.constant 0 : i32
    return %c0_i32, %c0_i32_0 : i32, i32
  }
  func.func @transform_19(%arg0: i32) -> (i32, i32) {
    %c0_i32 = arith.constant 0 : i32
    %c0_i32_0 = arith.constant 0 : i32
    %c0_i32_1 = arith.constant 0 : i32
    return %c0_i32, %c0_i32_0 : i32, i32
  }
  func.func @transform_20(%arg0: i32) -> (i32, i32) {
    %c0_i32 = arith.constant 0 : i32
    %c0_i32_0 = arith.constant 0 : i32
    %c0_i32_1 = arith.constant 0 : i32
    return %c0_i32, %c0_i32_0 : i32, i32
  }
  func.func @transform_21(%arg0: i32) -> (i32, i32) {
    %c0_i32 = arith.constant 0 : i32
    %c0_i32_0 = arith.constant 0 : i32
    %c0_i32_1 = arith.constant 0 : i32
    return %c0_i32, %c0_i32_0 : i32, i32
  }
  func.func @transform_22(%arg0: i32) -> (i32, i32) {
    %c0_i32 = arith.constant 0 : i32
    %c0_i32_0 = arith.constant 0 : i32
    %c0_i32_1 = arith.constant 0 : i32
    return %c0_i32, %c0_i32_0 : i32, i32
  }
  func.func @transform_23(%arg0: i32) -> (i32, i32) {
    %c0_i32 = arith.constant 0 : i32
    %c0_i32_0 = arith.constant 0 : i32
    %c0_i32_1 = arith.constant 0 : i32
    return %c0_i32, %c0_i32_0 : i32, i32
  }
  func.func @transform_24(%arg0: i32) -> (i32, i32) {
    %c0_i32 = arith.constant 0 : i32
    %c0_i32_0 = arith.constant 0 : i32
    %c0_i32_1 = arith.constant 0 : i32
    return %c0_i32, %c0_i32_0 : i32, i32
  }
  func.func @transform_25(%arg0: i32) -> (i32, i32) {
    %c0_i32 = arith.constant 0 : i32
    %c0_i32_0 = arith.constant 0 : i32
    %c0_i32_1 = arith.constant 0 : i32
    return %c0_i32, %c0_i32_0 : i32, i32
  }
  func.func @transform_26(%arg0: i32) -> (i32, i32, i32) {
    %c0_i32 = arith.constant 0 : i32
    %c0_i32_0 = arith.constant 0 : i32
    %c0_i32_1 = arith.constant 0 : i32
    return %arg0, %c0_i32, %c0_i32_0 : i32, i32, i32
  }
}

</mosaic_0001>

<llo_original>
// kernel: _grp_device.1
$region0: #{_grp_device.1}
  #allocation0 [shape = 'u32[]', space=smem, size = 0x4, offset = 0x4, fixed_abs, tag = 'smem constant byte address 0x4 - core index']
  #allocation1 [shape = 'u32[72,128]{1,0:T(1,128)}', space=vmem, size = 0x9000, scoped, tag = 'internal scratch']
  #allocation2 [shape = 'f32[1,1]{1,0:T(1,128)S(1)}', space=vmem, size = 0x200, scoped, tag = 'scoped memory for _grp_device.1']
  #allocation3 [shape = 'f32[1,1]{1,0:T(1,128)S(1)}', space=vmem, size = 0x200, scoped, tag = 'scoped memory for _grp_device.1']
  #allocation4 [shape = 'f32[1,1]{1,0:T(1,128)S(1)}', space=vmem, size = 0x200, scoped, tag = 'scoped memory for _grp_device.1']
  %s0 = inlined_call_operand.vmem [shape: s32[8,8], index: 0, kind: input, shape index: {}]
  %s1 = inlined_call_operand.vmem [shape: s32[8,1], index: 1, kind: input, shape index: {}]
  %s2 = inlined_call_operand.vmem [shape: s32[8,8], index: 2, kind: input, shape index: {}]
  %s3 = inlined_call_operand.vmem [shape: s32[8,1], index: 3, kind: input, shape index: {}]
  %s4 = inlined_call_operand.vmem [shape: s32[8,1], index: 4, kind: input, shape index: {}]
  %s5 = inlined_call_operand.vmem [shape: s32[8,1], index: 5, kind: input, shape index: {}]
  %s6 = inlined_call_operand.vmem [shape: bf16[16,32], index: 6, kind: input, shape index: {}]
  %s7 = inlined_call_operand.vmem [shape: bf16[8,32], index: 7, kind: input, shape index: {}]
  %s8 = inlined_call_operand.vmem [shape: bf16[16,32], index: 8, kind: input, shape index: {}]
  %s9 = inlined_call_operand.vmem [shape: bf16[8,32], index: 9, kind: input, shape index: {}]
  %s10 = inlined_call_operand.vmem [shape: f32[32,16], index: 10, kind: input, shape index: {}]
  %s11 = inlined_call_operand.vmem [shape: f32[32,16], index: 11, kind: input, shape index: {}]
  %s12 = inlined_call_operand.vmem [shape: f32[1,16], index: 12, kind: input, shape index: {}]
  %s13 = inlined_call_operand.vmem [shape: f32[1,16], index: 13, kind: input, shape index: {}]
  %s14 = inlined_call_operand.<no memory space> [shape: f32[1,1], index: 14, kind: input, shape index: {}]
  %s15 = inlined_call_operand.vmem [shape: f32[32,16], index: 15, kind: input, shape index: {}]
  %s16 = inlined_call_operand.vmem [shape: f32[32,16], index: 16, kind: input, shape index: {}]
  %s17 = inlined_call_operand.vmem [shape: f32[1,16], index: 17, kind: input, shape index: {}]
  %s18 = inlined_call_operand.vmem [shape: f32[1,16], index: 18, kind: input, shape index: {}]
  %s19 = inlined_call_operand.<no memory space> [shape: f32[1,1], index: 19, kind: input, shape index: {}]
  %s20 = inlined_call_operand.vmem [shape: f32[32,8], index: 20, kind: input, shape index: {}]
  %s21 = inlined_call_operand.vmem [shape: f32[32,8], index: 21, kind: input, shape index: {}]
  %s22 = inlined_call_operand.vmem [shape: f32[32,8], index: 22, kind: input, shape index: {}]
  %s23 = inlined_call_operand.vmem [shape: f32[1,8], index: 23, kind: input, shape index: {}]
  %s24 = inlined_call_operand.vmem [shape: f32[1,8], index: 24, kind: input, shape index: {}]
  %s25 = inlined_call_operand.<no memory space> [shape: f32[1,1], index: 25, kind: input, shape index: {}]
  %s26 = inlined_call_operand.hbm [shape: f32[1,1,8], index: 26, kind: output, shape index: {}]
  %s27 = sld [smem:[#allocation0]]
  $region114: #{_grp_device.1} parent=0
    _
  %s29 = ssub.s32 1, %s27
  %s30 = scalar_select 0, %s29, %s27
  %v31 = vstv %s14
  %32 = vst [vmem:[#allocation2] sm:$0x1] %v31
  %v33 = vstv %s19
  %34 = vst [vmem:[#allocation3] sm:$0x1] %v33
  %v35 = vstv %s25
  %36 = vst [vmem:[#allocation4] sm:$0x1] %v35
  $region1: #{_grp_device.1} parent=0
    #allocation5 [shape = 'u8[512]{0}', space=vmem, size = 0x400, scoped, tag = 'output window, operand 0, single buffered']
    #allocation6 [shape = 's32[1]{0}', space=sflag, size = 0x4, scoped, tag = 'scoped memory for _grp_device.1']
    %37 = vsyncpa [#allocation6], 0
    // Predicated region
    $region2: #{_grp_device.1} parent=1 // pred_check
      _
    $region3: #{_grp_device.1} parent=1 // pred_check_branch
      %39 = sbr.rel (0) target = $region5
    $region4: #{_grp_device.1} parent=1 // pred_region
      _
    $region5: #{_grp_device.1} parent=1 // pred_fallthru
      _
    // Predicated region
    $region6: #{_grp_device.1} parent=1 // pred_check
      _
    $region7: #{_grp_device.1} parent=1 // pred_check_branch
      %41 = sbr.rel (0) target = $region9
    $region8: #{_grp_device.1} parent=1 // pred_region
      _
    $region9: #{_grp_device.1} parent=1 // pred_fallthru
      _
    // Predicated region
    $region10: #{_grp_device.1} parent=1 // pred_check
      _
    $region11: #{_grp_device.1} parent=1 // pred_check_branch
      %43 = sbr.rel (0) target = $region13
    $region12: #{_grp_device.1} parent=1 // pred_region
      _
    $region13: #{_grp_device.1} parent=1 // pred_fallthru
      _
    // Predicated region
    $region14: #{_grp_device.1} parent=1 // pred_check
      _
    $region15: #{_grp_device.1} parent=1 // pred_check_branch
      %45 = sbr.rel (0) target = $region17
    $region16: #{_grp_device.1} parent=1 // pred_region
      _
    $region17: #{_grp_device.1} parent=1 // pred_fallthru
      _
    // Predicated region
    $region18: #{_grp_device.1} parent=1 // pred_check
      _
    $region19: #{_grp_device.1} parent=1 // pred_check_branch
      %47 = sbr.rel (0) target = $region21
    $region20: #{_grp_device.1} parent=1 // pred_region
      _
    $region21: #{_grp_device.1} parent=1 // pred_fallthru
      _
    // Predicated region
    $region22: #{_grp_device.1} parent=1 // pred_check
      _
    $region23: #{_grp_device.1} parent=1 // pred_check_branch
      %49 = sbr.rel (0) target = $region25
    $region24: #{_grp_device.1} parent=1 // pred_region
      _
    $region25: #{_grp_device.1} parent=1 // pred_fallthru
      _
    // Predicated region
    $region26: #{_grp_device.1} parent=1 // pred_check
      _
    $region27: #{_grp_device.1} parent=1 // pred_check_branch
      %51 = sbr.rel (0) target = $region29
    $region28: #{_grp_device.1} parent=1 // pred_region
      _
    $region29: #{_grp_device.1} parent=1 // pred_fallthru
      _
    // Predicated region
    $region30: #{_grp_device.1} parent=1 // pred_check
      _
    $region31: #{_grp_device.1} parent=1 // pred_check_branch
      %53 = sbr.rel (0) target = $region33
    $region32: #{_grp_device.1} parent=1 // pred_region
      _
    $region33: #{_grp_device.1} parent=1 // pred_fallthru
      _
    // Predicated region
    $region34: #{_grp_device.1} parent=1 // pred_check
      _
    $region35: #{_grp_device.1} parent=1 // pred_check_branch
      %55 = sbr.rel (0) target = $region37
    $region36: #{_grp_device.1} parent=1 // pred_region
      _
    $region37: #{_grp_device.1} parent=1 // pred_fallthru
      _
    // Predicated region
    $region38: #{_grp_device.1} parent=1 // pred_check
      _
    $region39: #{_grp_device.1} parent=1 // pred_check_branch
      %57 = sbr.rel (0) target = $region41
    $region40: #{_grp_device.1} parent=1 // pred_region
      _
    $region41: #{_grp_device.1} parent=1 // pred_fallthru
      _
    // Predicated region
    $region42: #{_grp_device.1} parent=1 // pred_check
      _
    $region43: #{_grp_device.1} parent=1 // pred_check_branch
      %59 = sbr.rel (0) target = $region45
    $region44: #{_grp_device.1} parent=1 // pred_region
      _
    $region45: #{_grp_device.1} parent=1 // pred_fallthru
      _
    // Predicated region
    $region46: #{_grp_device.1} parent=1 // pred_check
      _
    $region47: #{_grp_device.1} parent=1 // pred_check_branch
      %61 = sbr.rel (0) target = $region49
    $region48: #{_grp_device.1} parent=1 // pred_region
      _
    $region49: #{_grp_device.1} parent=1 // pred_fallthru
      _
    // Predicated region
    $region50: #{_grp_device.1} parent=1 // pred_check
      _
    $region51: #{_grp_device.1} parent=1 // pred_check_branch
      %63 = sbr.rel (0) target = $region53
    $region52: #{_grp_device.1} parent=1 // pred_region
      _
    $region53: #{_grp_device.1} parent=1 // pred_fallthru
      _
    // Predicated region
    $region54: #{_grp_device.1} parent=1 // pred_check
      _
    $region55: #{_grp_device.1} parent=1 // pred_check_branch
      %65 = sbr.rel (0) target = $region57
    $region56: #{_grp_device.1} parent=1 // pred_region
      _
    $region57: #{_grp_device.1} parent=1 // pred_fallthru
      _
    // Predicated region
    $region58: #{_grp_device.1} parent=1 // pred_check
      _
    $region59: #{_grp_device.1} parent=1 // pred_check_branch
      %67 = sbr.rel (0) target = $region61
    $region60: #{_grp_device.1} parent=1 // pred_region
      _
    $region61: #{_grp_device.1} parent=1 // pred_fallthru
      _
    // Predicated region
    $region62: #{_grp_device.1} parent=1 // pred_check
      _
    $region63: #{_grp_device.1} parent=1 // pred_check_branch
      %69 = sbr.rel (0) target = $region65
    $region64: #{_grp_device.1} parent=1 // pred_region
      _
    $region65: #{_grp_device.1} parent=1 // pred_fallthru
      _
    // Predicated region
    $region66: #{_grp_device.1} parent=1 // pred_check
      _
    $region67: #{_grp_device.1} parent=1 // pred_check_branch
      %71 = sbr.rel (0) target = $region69
    $region68: #{_grp_device.1} parent=1 // pred_region
      _
    $region69: #{_grp_device.1} parent=1 // pred_fallthru
      _
    // Predicated region
    $region70: #{_grp_device.1} parent=1 // pred_check
      _
    $region71: #{_grp_device.1} parent=1 // pred_check_branch
      %73 = sbr.rel (0) target = $region73
    $region72: #{_grp_device.1} parent=1 // pred_region
      _
    $region73: #{_grp_device.1} parent=1 // pred_fallthru
      _
    // Predicated region
    $region74: #{_grp_device.1} parent=1 // pred_check
      _
    $region75: #{_grp_device.1} parent=1 // pred_check_branch
      %75 = sbr.rel (0) target = $region77
    $region76: #{_grp_device.1} parent=1 // pred_region
      _
    $region77: #{_grp_device.1} parent=1 // pred_fallthru
      _
    // Predicated region
    $region78: #{_grp_device.1} parent=1 // pred_check
      _
    $region79: #{_grp_device.1} parent=1 // pred_check_branch
      %77 = sbr.rel (0) target = $region81
    $region80: #{_grp_device.1} parent=1 // pred_region
      _
    $region81: #{_grp_device.1} parent=1 // pred_fallthru
      _
    // Predicated region
    $region82: #{_grp_device.1} parent=1 // pred_check
      _
    $region83: #{_grp_device.1} parent=1 // pred_check_branch
      %79 = sbr.rel (0) target = $region85
    $region84: #{_grp_device.1} parent=1 // pred_region
      _
    $region85: #{_grp_device.1} parent=1 // pred_fallthru
      _
    // Predicated region
    $region86: #{_grp_device.1} parent=1 // pred_check
      _
    $region87: #{_grp_device.1} parent=1 // pred_check_branch
      %81 = sbr.rel (0) target = $region89
    $region88: #{_grp_device.1} parent=1 // pred_region
      _
    $region89: #{_grp_device.1} parent=1 // pred_fallthru
      _
    // Predicated region
    $region90: #{_grp_device.1} parent=1 // pred_check
      _
    $region91: #{_grp_device.1} parent=1 // pred_check_branch
      %83 = sbr.rel (0) target = $region93
    $region92: #{_grp_device.1} parent=1 // pred_region
      _
    $region93: #{_grp_device.1} parent=1 // pred_fallthru
      _
    // Predicated region
    $region94: #{_grp_device.1} parent=1 // pred_check
      _
    $region95: #{_grp_device.1} parent=1 // pred_check_branch
      %85 = sbr.rel (0) target = $region97
    $region96: #{_grp_device.1} parent=1 // pred_region
      _
    $region97: #{_grp_device.1} parent=1 // pred_fallthru
      _
    // Predicated region
    $region98: #{_grp_device.1} parent=1 // pred_check
      _
    $region99: #{_grp_device.1} parent=1 // pred_check_branch
      %87 = sbr.rel (0) target = $region101
    $region100: #{_grp_device.1} parent=1 // pred_region
      _
    $region101: #{_grp_device.1} parent=1 // pred_fallthru
      _
    // Predicated region
    $region102: #{_grp_device.1} parent=1 // pred_check
      _
    $region103: #{_grp_device.1} parent=1 // pred_check_branch
      %89 = sbr.rel (0) target = $region105
    $region104: #{_grp_device.1} parent=1 // pred_region
      _
    $region105: #{_grp_device.1} parent=1 // pred_fallthru
      _
    %v90 = vld [vmem:[%s6] sm:$0xf]
    %v91 = vld [vmem:[%s6 + $0x4] sm:$0xf]
    %v92 = vunpack.c.l.bf16 %v90
    %v93 = vunpack.c.l.bf16 %v91
    %v94 = vld [vmem:[%s7] sm:$0xf]
    %v95 = vunpack.c.l.bf16 %v94
    %v96 = vld [vmem:[%s8] sm:$0xf]
    %v97 = vld [vmem:[%s8 + $0x4] sm:$0xf]
    %v98 = vunpack.c.l.bf16 %v96
    %v99 = vunpack.c.l.bf16 %v97
    %v100 = vld [vmem:[%s9] sm:$0xf]
    %v101 = vunpack.c.l.bf16 %v100
    %v102 = vld [vmem:[%s4] sm:$0xff]
    %v103 = vlaneseq
    %v104 = vand.u32 %v103, 127
    %105 = vset.pattern.permute.xlu0 0
    %106 = vperm.xlu0 %105, %v102
    %v107 = vpop.permute.xlu0 %106
    %vm108 = vcmp.eq.s32.totalorder %v107, %v104
    %v109 = vsel %vm108, 1, 0
    %v110 = vcvt.s32.f32 %v109
    %vm111 = vcmask 64512
    %v113 = vsel %vm111, %v110, 0
    %115 = vmatpush.msra.mxu0 0.0
    %116 = vmatpush.msra.mxu0 0.0
    %117 = vmatpush.msra.mxu0 0.0
    %118 = vmatpush.msra.mxu0 0.0
    %119 = vmatpush.msra.mxu0 0.0
    %120 = vmatpush.msra.mxu0 0.0
    %121 = vmatpush.msra.mxu0 0.0
    %122 = vmatpush.msra.mxu0 0.0
    %123 = vmatpush.msra.mxu0 0.0
    %124 = vmatpush.msra.mxu0 0.0
    %125 = vmatpush.msra.mxu0 0.0
    %126 = vmatpush.msra.mxu0 0.0
    %127 = vmatpush.msra.mxu0 0.0
    %128 = vmatpush.msra.mxu0 0.0
    %129 = vmatpush.msra.mxu0 0.0
    %130 = vmatpush.msra.mxu0 %v95
    %131 = vmatmul.f32.gmra.mxu0 %v113
    %v132 = vpop.f32.mrf.mxu0
    %v133 = vadd.f32 0.0, %v132
    %134 = vdwg.mxu0
    %v135 = vld [vmem:[%s5] sm:$0xff]
    %136 = vset.pattern.permute.xlu0 0
    %137 = vperm.xlu0 %136, %v135
    %v138 = vpop.permute.xlu0 %137
    %vm139 = vcmp.eq.s32.totalorder %v138, %v104
    %v140 = vsel %vm139, 1, 0
    %v141 = vcvt.s32.f32 %v140
    %v143 = vsel %vm111, %v141, 0
    %145 = vmatpush.msra.mxu0 0.0
    %146 = vmatpush.msra.mxu0 0.0
    %147 = vmatpush.msra.mxu0 0.0
    %148 = vmatpush.msra.mxu0 0.0
    %149 = vmatpush.msra.mxu0 0.0
    %150 = vmatpush.msra.mxu0 0.0
    %151 = vmatpush.msra.mxu0 0.0
    %152 = vmatpush.msra.mxu0 0.0
    %153 = vmatpush.msra.mxu0 0.0
    %154 = vmatpush.msra.mxu0 0.0
    %155 = vmatpush.msra.mxu0 0.0
    %156 = vmatpush.msra.mxu0 0.0
    %157 = vmatpush.msra.mxu0 0.0
    %158 = vmatpush.msra.mxu0 0.0
    %159 = vmatpush.msra.mxu0 0.0
    %160 = vmatpush.msra.mxu0 %v101
    %161 = vmatmul.f32.gmra.mxu0 %v143
    %v162 = vpop.f32.mrf.mxu0
    %v163 = vadd.f32 0.0, %v162
    %164 = vdwg.mxu0
    %v165 = vld [vmem:[%s0] sm:$0xff]
    %v166 = vperm.slane %v165, 0
    %v167 = vlaneseq
    %v168 = vshrl.u32 %v167, 7
    %170 = vset.pattern.permute.xlu0 %v168
    %171 = vperm.xlu0 %170, %v166
    %v172 = vpop.permute.xlu0 %171
    %v173 = vperm.slane %v165, 1
    %v174 = vlaneseq
    %v175 = vshrl.u32 %v174, 7
    %177 = vset.pattern.permute.xlu0 %v175
    %178 = vperm.xlu0 %177, %v173
    %v179 = vpop.permute.xlu0 %178
    %v180 = vperm.slane %v165, 2
    %v181 = vlaneseq
    %v182 = vshrl.u32 %v181, 7
    %184 = vset.pattern.permute.xlu0 %v182
    %185 = vperm.xlu0 %184, %v180
    %v186 = vpop.permute.xlu0 %185
    %v187 = vperm.slane %v165, 3
    %v188 = vlaneseq
    %v189 = vshrl.u32 %v188, 7
    %191 = vset.pattern.permute.xlu0 %v189
    %192 = vperm.xlu0 %191, %v187
    %v193 = vpop.permute.xlu0 %192
    %v194 = vperm.slane %v165, 4
    %v195 = vlaneseq
    %v196 = vshrl.u32 %v195, 7
    %198 = vset.pattern.permute.xlu0 %v196
    %199 = vperm.xlu0 %198, %v194
    %v200 = vpop.permute.xlu0 %199
    %v201 = vperm.slane %v165, 5
    %v202 = vlaneseq
    %v203 = vshrl.u32 %v202, 7
    %205 = vset.pattern.permute.xlu0 %v203
    %206 = vperm.xlu0 %205, %v201
    %v207 = vpop.permute.xlu0 %206
    %v208 = vperm.slane %v165, 6
    %v209 = vlaneseq
    %v210 = vshrl.u32 %v209, 7
    %212 = vset.pattern.permute.xlu0 %v210
    %213 = vperm.xlu0 %212, %v208
    %v214 = vpop.permute.xlu0 %213
    %v215 = vperm.slane %v165, 7
    %v216 = vlaneseq
    %v217 = vshrl.u32 %v216, 7
    %219 = vset.pattern.permute.xlu0 %v217
    %220 = vperm.xlu0 %219, %v215
    %v221 = vpop.permute.xlu0 %220
    %vm222 = vcmp.eq.s32.totalorder %v172, %v104
    %vm223 = vcmp.eq.s32.totalorder %v179, %v104
    %vm224 = vcmp.eq.s32.totalorder %v186, %v104
    %vm225 = vcmp.eq.s32.totalorder %v193, %v104
    %vm226 = vcmp.eq.s32.totalorder %v200, %v104
    %vm227 = vcmp.eq.s32.totalorder %v207, %v104
    %vm228 = vcmp.eq.s32.totalorder %v214, %v104
    %vm229 = vcmp.eq.s32.totalorder %v221, %v104
    %v230 = vsel %vm222, 1, 0
    %v231 = vsel %vm223, 1, 0
    %v232 = vsel %vm224, 1, 0
    %v233 = vsel %vm225, 1, 0
    %v234 = vsel %vm226, 1, 0
    %v235 = vsel %vm227, 1, 0
    %v236 = vsel %vm228, 1, 0
    %v237 = vsel %vm229, 1, 0
    %v238 = vcvt.s32.f32 %v230
    %v239 = vcvt.s32.f32 %v231
    %v240 = vcvt.s32.f32 %v232
    %v241 = vcvt.s32.f32 %v233
    %v242 = vcvt.s32.f32 %v234
    %v243 = vcvt.s32.f32 %v235
    %v244 = vcvt.s32.f32 %v236
    %v245 = vcvt.s32.f32 %v237
    %vm246 = vcmask 130048
    %v248 = vsel %vm246, %v238, 0
    %v251 = vsel %vm246, %v239, 0
    %v254 = vsel %vm246, %v240, 0
    %v257 = vsel %vm246, %v241, 0
    %v260 = vsel %vm246, %v242, 0
    %v263 = vsel %vm246, %v243, 0
    %v266 = vsel %vm246, %v244, 0
    %v269 = vsel %vm246, %v245, 0
    %271 = vmatpush.msra.mxu0 0.0
    %272 = vmatpush.msra.mxu0 0.0
    %273 = vmatpush.msra.mxu0 0.0
    %274 = vmatpush.msra.mxu0 0.0
    %275 = vmatpush.msra.mxu0 0.0
    %276 = vmatpush.msra.mxu0 0.0
    %277 = vmatpush.msra.mxu0 0.0
    %278 = vmatpush.msra.mxu0 0.0
    %279 = vmatpush.msra.mxu0 0.0
    %280 = vmatpush.msra.mxu0 0.0
    %281 = vmatpush.msra.mxu0 0.0
    %282 = vmatpush.msra.mxu0 0.0
    %283 = vmatpush.msra.mxu0 0.0
    %284 = vmatpush.msra.mxu0 0.0
    %285 = vmatpush.msra.mxu0 %v93
    %286 = vmatpush.msra.mxu0 %v92
    %287 = vmatmul.f32.gmra.mxu0 %v248
    %v288 = vpop.f32.mrf.mxu0
    %v289 = vadd.f32 0.0, %v288
    %290 = vmatmul.f32.gmra.mxu0 %v251
    %v291 = vpop.f32.mrf.mxu0
    %v292 = vadd.f32 0.0, %v291
    %293 = vmatmul.f32.gmra.mxu0 %v254
    %v294 = vpop.f32.mrf.mxu0
    %v295 = vadd.f32 0.0, %v294
    %296 = vmatmul.f32.gmra.mxu0 %v257
    %v297 = vpop.f32.mrf.mxu0
    %v298 = vadd.f32 0.0, %v297
    %299 = vmatmul.f32.gmra.mxu0 %v260
    %v300 = vpop.f32.mrf.mxu0
    %v301 = vadd.f32 0.0, %v300
    %302 = vmatmul.f32.gmra.mxu0 %v263
    %v303 = vpop.f32.mrf.mxu0
    %v304 = vadd.f32 0.0, %v303
    %305 = vmatmul.f32.gmra.mxu0 %v266
    %v306 = vpop.f32.mrf.mxu0
    %v307 = vadd.f32 0.0, %v306
    %308 = vmatmul.f32.gmra.mxu0 %v269
    %v309 = vpop.f32.mrf.mxu0
    %v310 = vadd.f32 0.0, %v309
    %311 = vdwg.mxu0
    %v312 = vld [vmem:[%s2] sm:$0xff]
    %v313 = vperm.slane %v312, 0
    %v314 = vlaneseq
    %v315 = vshrl.u32 %v314, 7
    %317 = vset.pattern.permute.xlu0 %v315
    %318 = vperm.xlu0 %317, %v313
    %v319 = vpop.permute.xlu0 %318
    %v320 = vperm.slane %v312, 1
    %v321 = vlaneseq
    %v322 = vshrl.u32 %v321, 7
    %324 = vset.pattern.permute.xlu0 %v322
    %325 = vperm.xlu0 %324, %v320
    %v326 = vpop.permute.xlu0 %325
    %v327 = vperm.slane %v312, 2
    %v328 = vlaneseq
    %v329 = vshrl.u32 %v328, 7
    %331 = vset.pattern.permute.xlu0 %v329
    %332 = vperm.xlu0 %331, %v327
    %v333 = vpop.permute.xlu0 %332
    %v334 = vperm.slane %v312, 3
    %v335 = vlaneseq
    %v336 = vshrl.u32 %v335, 7
    %338 = vset.pattern.permute.xlu0 %v336
    %339 = vperm.xlu0 %338, %v334
    %v340 = vpop.permute.xlu0 %339
    %v341 = vperm.slane %v312, 4
    %v342 = vlaneseq
    %v343 = vshrl.u32 %v342, 7
    %345 = vset.pattern.permute.xlu0 %v343
    %346 = vperm.xlu0 %345, %v341
    %v347 = vpop.permute.xlu0 %346
    %v348 = vperm.slane %v312, 5
    %v349 = vlaneseq
    %v350 = vshrl.u32 %v349, 7
    %352 = vset.pattern.permute.xlu0 %v350
    %353 = vperm.xlu0 %352, %v348
    %v354 = vpop.permute.xlu0 %353
    %v355 = vperm.slane %v312, 6
    %v356 = vlaneseq
    %v357 = vshrl.u32 %v356, 7
    %359 = vset.pattern.permute.xlu0 %v357
    %360 = vperm.xlu0 %359, %v355
    %v361 = vpop.permute.xlu0 %360
    %v362 = vperm.slane %v312, 7
    %v363 = vlaneseq
    %v364 = vshrl.u32 %v363, 7
    %366 = vset.pattern.permute.xlu0 %v364
    %367 = vperm.xlu0 %366, %v362
    %v368 = vpop.permute.xlu0 %367
    %vm369 = vcmp.eq.s32.totalorder %v319, %v104
    %vm370 = vcmp.eq.s32.totalorder %v326, %v104
    %vm371 = vcmp.eq.s32.totalorder %v333, %v104
    %vm372 = vcmp.eq.s32.totalorder %v340, %v104
    %vm373 = vcmp.eq.s32.totalorder %v347, %v104
    %vm374 = vcmp.eq.s32.totalorder %v354, %v104
    %vm375 = vcmp.eq.s32.totalorder %v361, %v104
    %vm376 = vcmp.eq.s32.totalorder %v368, %v104
    %v377 = vsel %vm369, 1, 0
    %v378 = vsel %vm370, 1, 0
    %v379 = vsel %vm371, 1, 0
    %v380 = vsel %vm372, 1, 0
    %v381 = vsel %vm373, 1, 0
    %v382 = vsel %vm374, 1, 0
    %v383 = vsel %vm375, 1, 0
    %v384 = vsel %vm376, 1, 0
    %v385 = vcvt.s32.f32 %v377
    %v386 = vcvt.s32.f32 %v378
    %v387 = vcvt.s32.f32 %v379
    %v388 = vcvt.s32.f32 %v380
    %v389 = vcvt.s32.f32 %v381
    %v390 = vcvt.s32.f32 %v382
    %v391 = vcvt.s32.f32 %v383
    %v392 = vcvt.s32.f32 %v384
    %v394 = vsel %vm246, %v385, 0
    %v397 = vsel %vm246, %v386, 0
    %v400 = vsel %vm246, %v387, 0
    %v403 = vsel %vm246, %v388, 0
    %v406 = vsel %vm246, %v389, 0
    %v409 = vsel %vm246, %v390, 0
    %v412 = vsel %vm246, %v391, 0
    %v415 = vsel %vm246, %v392, 0
    %417 = vmatpush.msra.mxu0 0.0
    %418 = vmatpush.msra.mxu0 0.0
    %419 = vmatpush.msra.mxu0 0.0
    %420 = vmatpush.msra.mxu0 0.0
    %421 = vmatpush.msra.mxu0 0.0
    %422 = vmatpush.msra.mxu0 0.0
    %423 = vmatpush.msra.mxu0 0.0
    %424 = vmatpush.msra.mxu0 0.0
    %425 = vmatpush.msra.mxu0 0.0
    %426 = vmatpush.msra.mxu0 0.0
    %427 = vmatpush.msra.mxu0 0.0
    %428 = vmatpush.msra.mxu0 0.0
    %429 = vmatpush.msra.mxu0 0.0
    %430 = vmatpush.msra.mxu0 0.0
    %431 = vmatpush.msra.mxu0 %v99
    %432 = vmatpush.msra.mxu0 %v98
    %433 = vmatmul.f32.gmra.mxu0 %v394
    %v434 = vpop.f32.mrf.mxu0
    %v435 = vadd.f32 0.0, %v434
    %436 = vmatmul.f32.gmra.mxu0 %v397
    %v437 = vpop.f32.mrf.mxu0
    %v438 = vadd.f32 0.0, %v437
    %439 = vmatmul.f32.gmra.mxu0 %v400
    %v440 = vpop.f32.mrf.mxu0
    %v441 = vadd.f32 0.0, %v440
    %442 = vmatmul.f32.gmra.mxu0 %v403
    %v443 = vpop.f32.mrf.mxu0
    %v444 = vadd.f32 0.0, %v443
    %445 = vmatmul.f32.gmra.mxu0 %v406
    %v446 = vpop.f32.mrf.mxu0
    %v447 = vadd.f32 0.0, %v446
    %448 = vmatmul.f32.gmra.mxu0 %v409
    %v449 = vpop.f32.mrf.mxu0
    %v450 = vadd.f32 0.0, %v449
    %451 = vmatmul.f32.gmra.mxu0 %v412
    %v452 = vpop.f32.mrf.mxu0
    %v453 = vadd.f32 0.0, %v452
    %454 = vmatmul.f32.gmra.mxu0 %v415
    %v455 = vpop.f32.mrf.mxu0
    %v456 = vadd.f32 0.0, %v455
    %457 = vdwg.mxu0
    %v458 = vld [vmem:[%s1] sm:$0xff]
    %v459 = vld [vmem:[%s10] sm:$0xff]
    %v460 = vld [vmem:[%s10 + $0x8] sm:$0xff]
    %v461 = vld [vmem:[%s10 + $0x10] sm:$0xff]
    %v462 = vld [vmem:[%s10 + $0x18] sm:$0xff]
    %v463 = vld [vmem:[%s11] sm:$0xff]
    %v464 = vld [vmem:[%s11 + $0x8] sm:$0xff]
    %v465 = vld [vmem:[%s11 + $0x10] sm:$0xff]
    %v466 = vld [vmem:[%s11 + $0x18] sm:$0xff]
    %v467 = vld [vmem:[%s12] sm:$0x1]
    %v468 = vld [vmem:[%s13] sm:$0x1]
    %v469 = vld [vmem:[#allocation2] sm:$0x1]
    %vm470 = vcmask 261120
    %v472 = vsel %vm470, %v289, 0
    %v475 = vsel %vm470, %v292, 0
    %v478 = vsel %vm470, %v295, 0
    %v481 = vsel %vm470, %v298, 0
    %v484 = vsel %vm470, %v301, 0
    %v487 = vsel %vm470, %v304, 0
    %v490 = vsel %vm470, %v307, 0
    %v493 = vsel %vm470, %v310, 0
    %495 = vmatpush.msra.mxu0 0.0
    %496 = vmatpush.msra.mxu0 0.0
    %497 = vmatpush.msra.mxu0 0.0
    %498 = vmatpush.msra.mxu0 0.0
    %499 = vmatpush.msra.mxu0 0.0
    %500 = vmatpush.msra.mxu0 0.0
    %501 = vmatpush.msra.mxu0 0.0
    %502 = vmatpush.msra.mxu0 0.0
    %503 = vmatpush.msra.mxu0 0.0
    %504 = vmatpush.msra.mxu0 0.0
    %505 = vmatpush.msra.mxu0 0.0
    %506 = vmatpush.msra.mxu0 0.0
    %507 = vmatpush.msra.mxu0 %v462
    %508 = vmatpush.msra.mxu0 %v461
    %509 = vmatpush.msra.mxu0 %v460
    %510 = vmatpush.msra.mxu0 %v459
    %511 = vmatmul.f32.gmra.mxu0 %v472
    %v512 = vpop.f32.mrf.mxu0
    %v513 = vadd.f32 0.0, %v512
    %514 = vmatmul.f32.gmra.mxu0 %v475
    %v515 = vpop.f32.mrf.mxu0
    %v516 = vadd.f32 0.0, %v515
    %517 = vmatmul.f32.gmra.mxu0 %v478
    %v518 = vpop.f32.mrf.mxu0
    %v519 = vadd.f32 0.0, %v518
    %520 = vmatmul.f32.gmra.mxu0 %v481
    %v521 = vpop.f32.mrf.mxu0
    %v522 = vadd.f32 0.0, %v521
    %523 = vmatmul.f32.gmra.mxu0 %v484
    %v524 = vpop.f32.mrf.mxu0
    %v525 = vadd.f32 0.0, %v524
    %526 = vmatmul.f32.gmra.mxu0 %v487
    %v527 = vpop.f32.mrf.mxu0
    %v528 = vadd.f32 0.0, %v527
    %529 = vmatmul.f32.gmra.mxu0 %v490
    %v530 = vpop.f32.mrf.mxu0
    %v531 = vadd.f32 0.0, %v530
    %532 = vmatmul.f32.gmra.mxu0 %v493
    %v533 = vpop.f32.mrf.mxu0
    %v534 = vadd.f32 0.0, %v533
    %535 = vdwg.mxu0
    %v537 = vperm.slane %v467, 0
    %v540 = vsel %vm470, %v133, 0
    %542 = vmatpush.msra.mxu0 0.0
    %543 = vmatpush.msra.mxu0 0.0
    %544 = vmatpush.msra.mxu0 0.0
    %545 = vmatpush.msra.mxu0 0.0
    %546 = vmatpush.msra.mxu0 0.0
    %547 = vmatpush.msra.mxu0 0.0
    %548 = vmatpush.msra.mxu0 0.0
    %549 = vmatpush.msra.mxu0 0.0
    %550 = vmatpush.msra.mxu0 0.0
    %551 = vmatpush.msra.mxu0 0.0
    %552 = vmatpush.msra.mxu0 0.0
    %553 = vmatpush.msra.mxu0 0.0
    %554 = vmatpush.msra.mxu0 %v466
    %555 = vmatpush.msra.mxu0 %v465
    %556 = vmatpush.msra.mxu0 %v464
    %557 = vmatpush.msra.mxu0 %v463
    %558 = vmatmul.f32.gmra.mxu0 %v540
    %v559 = vpop.f32.mrf.mxu0
    %v560 = vadd.f32 %v537, %v559
    %561 = vdwg.mxu0
    %v563 = vrot.slane %v560, 1
    %v564 = vrot.slane %v560, 2
    %v565 = vrot.slane %v560, 3
    %v566 = vrot.slane %v560, 4
    %v567 = vrot.slane %v560, 5
    %v568 = vrot.slane %v560, 6
    %v569 = vrot.slane %v560, 7
    %v570 = vperm.slane %v560, 0
    %v571 = vperm.slane %v563, 0
    %v572 = vperm.slane %v564, 0
    %v573 = vperm.slane %v565, 0
    %v574 = vperm.slane %v566, 0
    %v575 = vperm.slane %v567, 0
    %v576 = vperm.slane %v568, 0
    %v577 = vperm.slane %v569, 0
    %v586 = vadd.f32 %v513, %v570
    %v587 = vadd.f32 %v516, %v571
    %v588 = vadd.f32 %v519, %v572
    %v589 = vadd.f32 %v522, %v573
    %v590 = vadd.f32 %v525, %v574
    %v591 = vadd.f32 %v528, %v575
    %v592 = vadd.f32 %v531, %v576
    %v593 = vadd.f32 %v534, %v577
    %v594 = vmax.f32 %v586, 0.0
    %v595 = vmax.f32 %v587, 0.0
    %v596 = vmax.f32 %v588, 0.0
    %v597 = vmax.f32 %v589, 0.0
    %v598 = vmax.f32 %v590, 0.0
    %v599 = vmax.f32 %v591, 0.0
    %v600 = vmax.f32 %v592, 0.0
    %v601 = vmax.f32 %v593, 0.0
    %v603 = vperm.slane %v468, 0
    %v605 = vmul.f32 %v594, %v603
    %v606 = vmul.f32 %v595, %v603
    %v607 = vmul.f32 %v596, %v603
    %v608 = vmul.f32 %v597, %v603
    %v609 = vmul.f32 %v598, %v603
    %v610 = vmul.f32 %v599, %v603
    %v611 = vmul.f32 %v600, %v603
    %v612 = vmul.f32 %v601, %v603
    %v613 = vsel %vm246, %v605, 0.0
    %614 = vadd.xlane.f32.xlu0 %v613
    %v615 = vpop.xlane.xlu0 %614
    %v616 = vsel %vm246, %v606, 0.0
    %617 = vadd.xlane.f32.xlu0 %v616
    %v618 = vpop.xlane.xlu0 %617
    %v619 = vsel %vm246, %v607, 0.0
    %620 = vadd.xlane.f32.xlu0 %v619
    %v621 = vpop.xlane.xlu0 %620
    %v622 = vsel %vm246, %v608, 0.0
    %623 = vadd.xlane.f32.xlu0 %v622
    %v624 = vpop.xlane.xlu0 %623
    %v625 = vsel %vm246, %v609, 0.0
    %626 = vadd.xlane.f32.xlu0 %v625
    %v627 = vpop.xlane.xlu0 %626
    %v628 = vsel %vm246, %v610, 0.0
    %629 = vadd.xlane.f32.xlu0 %v628
    %v630 = vpop.xlane.xlu0 %629
    %v631 = vsel %vm246, %v611, 0.0
    %632 = vadd.xlane.f32.xlu0 %v631
    %v633 = vpop.xlane.xlu0 %632
    %v634 = vsel %vm246, %v612, 0.0
    %635 = vadd.xlane.f32.xlu0 %v634
    %v636 = vpop.xlane.xlu0 %635
    %v638 = vperm.slane %v469, 0
    %639 = vset.pattern.permute.xlu0 0
    %640 = vperm.xlu0 %639, %v638
    %v641 = vpop.permute.xlu0 %640
    %v643 = vadd.f32 %v615, %v641
    %v644 = vadd.f32 %v618, %v641
    %v645 = vadd.f32 %v621, %v641
    %v646 = vadd.f32 %v624, %v641
    %v647 = vadd.f32 %v627, %v641
    %v648 = vadd.f32 %v630, %v641
    %v649 = vadd.f32 %v633, %v641
    %v650 = vadd.f32 %v636, %v641
    %651 = vset.pattern.permute.xlu0 0
    %652 = vperm.xlu0 %651, %v458
    %v653 = vpop.permute.xlu0 %652
    %vm654 = vcmp.lt.s32.totalorder %v104, %v653
    %v663 = vperm.slane %v643, %v104
    %v664 = vperm.slane %v644, %v104
    %v665 = vperm.slane %v645, %v104
    %v666 = vperm.slane %v646, %v104
    %v667 = vperm.slane %v647, %v104
    %v668 = vperm.slane %v648, %v104
    %v669 = vperm.slane %v649, %v104
    %v670 = vperm.slane %v650, %v104
    %vm671 = vcmask 1041409
    %v672 = vsel %vm671, %v664, %v663
    %vm673 = vcmask 1042434
    %v674 = vsel %vm673, %v665, %v672
    %vm675 = vcmask 1043459
    %v676 = vsel %vm675, %v666, %v674
    %vm677 = vcmask 1044484
    %v678 = vsel %vm677, %v667, %v676
    %vm679 = vcmask 1045509
    %v680 = vsel %vm679, %v668, %v678
    %vm681 = vcmask 1046534
    %v682 = vsel %vm681, %v669, %v680
    %vm683 = vcmask 1047559
    %v684 = vsel %vm683, %v670, %v682
    %v686 = vsel %vm654, %v684, -1e+30
    %v687 = vsel %vm111, %v686, -inf
    %688 = vmax.xlane.f32.xlu0 %v687
    %v689 = vpop.xlane.xlu0 %688
    %v690 = vsub.f32 %v686, %v689
    %v691 = vmul.f32 %v690, 1.442695
    %v692 = vpow.pop %v691
    %v693 = vsel %vm111, %v692, 0.0
    %694 = vadd.xlane.f32.xlu0 %v693
    %v695 = vpop.xlane.xlu0 %694
    %v696 = vmax.f32 %v695, 1e-20
    %v697 = vrcp.pop %v696
    %v698 = vmul.f32 %v692, %v697
    %v700 = vrot.slane %v698, 1
    %v701 = vrot.slane %v698, 2
    %v702 = vrot.slane %v698, 3
    %v703 = vrot.slane %v698, 4
    %v704 = vrot.slane %v698, 5
    %v705 = vrot.slane %v698, 6
    %v706 = vrot.slane %v698, 7
    %v707 = vsel %vm111, %v698, 0
    %709 = vmatpush.msra.mxu0 0.0
    %710 = vmatpush.msra.mxu0 0.0
    %711 = vmatpush.msra.mxu0 0.0
    %712 = vmatpush.msra.mxu0 0.0
    %713 = vmatpush.msra.mxu0 0.0
    %714 = vmatpush.msra.mxu0 0.0
    %715 = vmatpush.msra.mxu0 0.0
    %716 = vmatpush.msra.mxu0 0.0
    %717 = vmatpush.msra.mxu0 0.0
    %718 = vmatpush.msra.mxu0 0.0
    %719 = vmatpush.msra.mxu0 0.0
    %720 = vmatpush.msra.mxu0 0.0
    %721 = vmatpush.msra.mxu0 0.0
    %722 = vmatpush.msra.mxu0 0.0
    %723 = vmatpush.msra.mxu0 0.0
    %724 = vmatpush.msra.mxu0 %v289
    %725 = vmatmul.f32.gmra.mxu0 %v707
    %v726 = vpop.f32.mrf.mxu0
    %v727 = vadd.f32 0.0, %v726
    %728 = vdwg.mxu0
    %v729 = vsel %vm111, %v700, 0
    %731 = vmatpush.msra.mxu0 0.0
    %732 = vmatpush.msra.mxu0 0.0
    %733 = vmatpush.msra.mxu0 0.0
    %734 = vmatpush.msra.mxu0 0.0
    %735 = vmatpush.msra.mxu0 0.0
    %736 = vmatpush.msra.mxu0 0.0
    %737 = vmatpush.msra.mxu0 0.0
    %738 = vmatpush.msra.mxu0 0.0
    %739 = vmatpush.msra.mxu0 0.0
    %740 = vmatpush.msra.mxu0 0.0
    %741 = vmatpush.msra.mxu0 0.0
    %742 = vmatpush.msra.mxu0 0.0
    %743 = vmatpush.msra.mxu0 0.0
    %744 = vmatpush.msra.mxu0 0.0
    %745 = vmatpush.msra.mxu0 0.0
    %746 = vmatpush.msra.mxu0 %v292
    %747 = vmatmul.f32.gmra.mxu0 %v729
    %v748 = vpop.f32.mrf.mxu0
    %v749 = vadd.f32 0.0, %v748
    %750 = vdwg.mxu0
    %v751 = vsel %vm111, %v701, 0
    %753 = vmatpush.msra.mxu0 0.0
    %754 = vmatpush.msra.mxu0 0.0
    %755 = vmatpush.msra.mxu0 0.0
    %756 = vmatpush.msra.mxu0 0.0
    %757 = vmatpush.msra.mxu0 0.0
    %758 = vmatpush.msra.mxu0 0.0
    %759 = vmatpush.msra.mxu0 0.0
    %760 = vmatpush.msra.mxu0 0.0
    %761 = vmatpush.msra.mxu0 0.0
    %762 = vmatpush.msra.mxu0 0.0
    %763 = vmatpush.msra.mxu0 0.0
    %764 = vmatpush.msra.mxu0 0.0
    %765 = vmatpush.msra.mxu0 0.0
    %766 = vmatpush.msra.mxu0 0.0
    %767 = vmatpush.msra.mxu0 0.0
    %768 = vmatpush.msra.mxu0 %v295
    %769 = vmatmul.f32.gmra.mxu0 %v751
    %v770 = vpop.f32.mrf.mxu0
    %v771 = vadd.f32 0.0, %v770
    %772 = vdwg.mxu0
    %v773 = vsel %vm111, %v702, 0
    %775 = vmatpush.msra.mxu0 0.0
    %776 = vmatpush.msra.mxu0 0.0
    %777 = vmatpush.msra.mxu0 0.0
    %778 = vmatpush.msra.mxu0 0.0
    %779 = vmatpush.msra.mxu0 0.0
    %780 = vmatpush.msra.mxu0 0.0
    %781 = vmatpush.msra.mxu0 0.0
    %782 = vmatpush.msra.mxu0 0.0
    %783 = vmatpush.msra.mxu0 0.0
    %784 = vmatpush.msra.mxu0 0.0
    %785 = vmatpush.msra.mxu0 0.0
    %786 = vmatpush.msra.mxu0 0.0
    %787 = vmatpush.msra.mxu0 0.0
    %788 = vmatpush.msra.mxu0 0.0
    %789 = vmatpush.msra.mxu0 0.0
    %790 = vmatpush.msra.mxu0 %v298
    %791 = vmatmul.f32.gmra.mxu0 %v773
    %v792 = vpop.f32.mrf.mxu0
    %v793 = vadd.f32 0.0, %v792
    %794 = vdwg.mxu0
    %v795 = vsel %vm111, %v703, 0
    %797 = vmatpush.msra.mxu0 0.0
    %798 = vmatpush.msra.mxu0 0.0
    %799 = vmatpush.msra.mxu0 0.0
    %800 = vmatpush.msra.mxu0 0.0
    %801 = vmatpush.msra.mxu0 0.0
    %802 = vmatpush.msra.mxu0 0.0
    %803 = vmatpush.msra.mxu0 0.0
    %804 = vmatpush.msra.mxu0 0.0
    %805 = vmatpush.msra.mxu0 0.0
    %806 = vmatpush.msra.mxu0 0.0
    %807 = vmatpush.msra.mxu0 0.0
    %808 = vmatpush.msra.mxu0 0.0
    %809 = vmatpush.msra.mxu0 0.0
    %810 = vmatpush.msra.mxu0 0.0
    %811 = vmatpush.msra.mxu0 0.0
    %812 = vmatpush.msra.mxu0 %v301
    %813 = vmatmul.f32.gmra.mxu0 %v795
    %v814 = vpop.f32.mrf.mxu0
    %v815 = vadd.f32 0.0, %v814
    %816 = vdwg.mxu0
    %v817 = vsel %vm111, %v704, 0
    %819 = vmatpush.msra.mxu0 0.0
    %820 = vmatpush.msra.mxu0 0.0
    %821 = vmatpush.msra.mxu0 0.0
    %822 = vmatpush.msra.mxu0 0.0
    %823 = vmatpush.msra.mxu0 0.0
    %824 = vmatpush.msra.mxu0 0.0
    %825 = vmatpush.msra.mxu0 0.0
    %826 = vmatpush.msra.mxu0 0.0
    %827 = vmatpush.msra.mxu0 0.0
    %828 = vmatpush.msra.mxu0 0.0
    %829 = vmatpush.msra.mxu0 0.0
    %830 = vmatpush.msra.mxu0 0.0
    %831 = vmatpush.msra.mxu0 0.0
    %832 = vmatpush.msra.mxu0 0.0
    %833 = vmatpush.msra.mxu0 0.0
    %834 = vmatpush.msra.mxu0 %v304
    %835 = vmatmul.f32.gmra.mxu0 %v817
    %v836 = vpop.f32.mrf.mxu0
    %v837 = vadd.f32 0.0, %v836
    %838 = vdwg.mxu0
    %v839 = vsel %vm111, %v705, 0
    %841 = vmatpush.msra.mxu0 0.0
    %842 = vmatpush.msra.mxu0 0.0
    %843 = vmatpush.msra.mxu0 0.0
    %844 = vmatpush.msra.mxu0 0.0
    %845 = vmatpush.msra.mxu0 0.0
    %846 = vmatpush.msra.mxu0 0.0
    %847 = vmatpush.msra.mxu0 0.0
    %848 = vmatpush.msra.mxu0 0.0
    %849 = vmatpush.msra.mxu0 0.0
    %850 = vmatpush.msra.mxu0 0.0
    %851 = vmatpush.msra.mxu0 0.0
    %852 = vmatpush.msra.mxu0 0.0
    %853 = vmatpush.msra.mxu0 0.0
    %854 = vmatpush.msra.mxu0 0.0
    %855 = vmatpush.msra.mxu0 0.0
    %856 = vmatpush.msra.mxu0 %v307
    %857 = vmatmul.f32.gmra.mxu0 %v839
    %v858 = vpop.f32.mrf.mxu0
    %v859 = vadd.f32 0.0, %v858
    %860 = vdwg.mxu0
    %v861 = vsel %vm111, %v706, 0
    %863 = vmatpush.msra.mxu0 0.0
    %864 = vmatpush.msra.mxu0 0.0
    %865 = vmatpush.msra.mxu0 0.0
    %866 = vmatpush.msra.mxu0 0.0
    %867 = vmatpush.msra.mxu0 0.0
    %868 = vmatpush.msra.mxu0 0.0
    %869 = vmatpush.msra.mxu0 0.0
    %870 = vmatpush.msra.mxu0 0.0
    %871 = vmatpush.msra.mxu0 0.0
    %872 = vmatpush.msra.mxu0 0.0
    %873 = vmatpush.msra.mxu0 0.0
    %874 = vmatpush.msra.mxu0 0.0
    %875 = vmatpush.msra.mxu0 0.0
    %876 = vmatpush.msra.mxu0 0.0
    %877 = vmatpush.msra.mxu0 0.0
    %878 = vmatpush.msra.mxu0 %v310
    %879 = vmatmul.f32.gmra.mxu0 %v861
    %v880 = vpop.f32.mrf.mxu0
    %v881 = vadd.f32 0.0, %v880
    %882 = vdwg.mxu0
    %v883 = vrot.slane %v133, 1
    %v884 = vrot.slane %v133, 2
    %v885 = vrot.slane %v133, 3
    %v886 = vrot.slane %v133, 4
    %v887 = vrot.slane %v133, 5
    %v888 = vrot.slane %v133, 6
    %v889 = vrot.slane %v133, 7
    %v898 = vadd.f32 %v727, %v133
    %v899 = vadd.f32 %v749, %v883
    %v900 = vadd.f32 %v771, %v884
    %v901 = vadd.f32 %v793, %v885
    %v902 = vadd.f32 %v815, %v886
    %v903 = vadd.f32 %v837, %v887
    %v904 = vadd.f32 %v859, %v888
    %v905 = vadd.f32 %v881, %v889
    %v906 = vld [vmem:[%s3] sm:$0xff]
    %v907 = vld [vmem:[%s15] sm:$0xff]
    %v908 = vld [vmem:[%s15 + $0x8] sm:$0xff]
    %v909 = vld [vmem:[%s15 + $0x10] sm:$0xff]
    %v910 = vld [vmem:[%s15 + $0x18] sm:$0xff]
    %v911 = vld [vmem:[%s16] sm:$0xff]
    %v912 = vld [vmem:[%s16 + $0x8] sm:$0xff]
    %v913 = vld [vmem:[%s16 + $0x10] sm:$0xff]
    %v914 = vld [vmem:[%s16 + $0x18] sm:$0xff]
    %v915 = vld [vmem:[%s17] sm:$0x1]
    %v916 = vld [vmem:[%s18] sm:$0x1]
    %v917 = vld [vmem:[#allocation3] sm:$0x1]
    %v919 = vsel %vm470, %v435, 0
    %v922 = vsel %vm470, %v438, 0
    %v925 = vsel %vm470, %v441, 0
    %v928 = vsel %vm470, %v444, 0
    %v931 = vsel %vm470, %v447, 0
    %v934 = vsel %vm470, %v450, 0
    %v937 = vsel %vm470, %v453, 0
    %v940 = vsel %vm470, %v456, 0
    %942 = vmatpush.msra.mxu0 0.0
    %943 = vmatpush.msra.mxu0 0.0
    %944 = vmatpush.msra.mxu0 0.0
    %945 = vmatpush.msra.mxu0 0.0
    %946 = vmatpush.msra.mxu0 0.0
    %947 = vmatpush.msra.mxu0 0.0
    %948 = vmatpush.msra.mxu0 0.0
    %949 = vmatpush.msra.mxu0 0.0
    %950 = vmatpush.msra.mxu0 0.0
    %951 = vmatpush.msra.mxu0 0.0
    %952 = vmatpush.msra.mxu0 0.0
    %953 = vmatpush.msra.mxu0 0.0
    %954 = vmatpush.msra.mxu0 %v910
    %955 = vmatpush.msra.mxu0 %v909
    %956 = vmatpush.msra.mxu0 %v908
    %957 = vmatpush.msra.mxu0 %v907
    %958 = vmatmul.f32.gmra.mxu0 %v919
    %v959 = vpop.f32.mrf.mxu0
    %v960 = vadd.f32 0.0, %v959
    %961 = vmatmul.f32.gmra.mxu0 %v922
    %v962 = vpop.f32.mrf.mxu0
    %v963 = vadd.f32 0.0, %v962
    %964 = vmatmul.f32.gmra.mxu0 %v925
    %v965 = vpop.f32.mrf.mxu0
    %v966 = vadd.f32 0.0, %v965
    %967 = vmatmul.f32.gmra.mxu0 %v928
    %v968 = vpop.f32.mrf.mxu0
    %v969 = vadd.f32 0.0, %v968
    %970 = vmatmul.f32.gmra.mxu0 %v931
    %v971 = vpop.f32.mrf.mxu0
    %v972 = vadd.f32 0.0, %v971
    %973 = vmatmul.f32.gmra.mxu0 %v934
    %v974 = vpop.f32.mrf.mxu0
    %v975 = vadd.f32 0.0, %v974
    %976 = vmatmul.f32.gmra.mxu0 %v937
    %v977 = vpop.f32.mrf.mxu0
    %v978 = vadd.f32 0.0, %v977
    %979 = vmatmul.f32.gmra.mxu0 %v940
    %v980 = vpop.f32.mrf.mxu0
    %v981 = vadd.f32 0.0, %v980
    %982 = vdwg.mxu0
    %v984 = vperm.slane %v915, 0
    %v994 = vrot.slane %v899, 7
    %v995 = vsel %vm671, %v994, %v898
    %v996 = vrot.slane %v900, 6
    %v997 = vsel %vm673, %v996, %v995
    %v998 = vrot.slane %v901, 5
    %v999 = vsel %vm675, %v998, %v997
    %v1000 = vrot.slane %v902, 4
    %v1001 = vsel %vm677, %v1000, %v999
    %v1002 = vrot.slane %v903, 3
    %v1003 = vsel %vm679, %v1002, %v1001
    %v1004 = vrot.slane %v904, 2
    %v1005 = vsel %vm681, %v1004, %v1003
    %v1006 = vrot.slane %v905, 1
    %v1007 = vsel %vm683, %v1006, %v1005
    %v1008 = vsel %vm470, %v1007, 0
    %1010 = vmatpush.msra.mxu0 0.0
    %1011 = vmatpush.msra.mxu0 0.0
    %1012 = vmatpush.msra.mxu0 0.0
    %1013 = vmatpush.msra.mxu0 0.0
    %1014 = vmatpush.msra.mxu0 0.0
    %1015 = vmatpush.msra.mxu0 0.0
    %1016 = vmatpush.msra.mxu0 0.0
    %1017 = vmatpush.msra.mxu0 0.0
    %1018 = vmatpush.msra.mxu0 0.0
    %1019 = vmatpush.msra.mxu0 0.0
    %1020 = vmatpush.msra.mxu0 0.0
    %1021 = vmatpush.msra.mxu0 0.0
    %1022 = vmatpush.msra.mxu0 %v914
    %1023 = vmatpush.msra.mxu0 %v913
    %1024 = vmatpush.msra.mxu0 %v912
    %1025 = vmatpush.msra.mxu0 %v911
    %1026 = vmatmul.f32.gmra.mxu0 %v1008
    %v1027 = vpop.f32.mrf.mxu0
    %v1028 = vadd.f32 %v984, %v1027
    %1029 = vdwg.mxu0
    %v1031 = vrot.slane %v1028, 1
    %v1032 = vrot.slane %v1028, 2
    %v1033 = vrot.slane %v1028, 3
    %v1034 = vrot.slane %v1028, 4
    %v1035 = vrot.slane %v1028, 5
    %v1036 = vrot.slane %v1028, 6
    %v1037 = vrot.slane %v1028, 7
    %v1038 = vperm.slane %v1028, 0
    %v1039 = vperm.slane %v1031, 0
    %v1040 = vperm.slane %v1032, 0
    %v1041 = vperm.slane %v1033, 0
    %v1042 = vperm.slane %v1034, 0
    %v1043 = vperm.slane %v1035, 0
    %v1044 = vperm.slane %v1036, 0
    %v1045 = vperm.slane %v1037, 0
    %v1054 = vadd.f32 %v960, %v1038
    %v1055 = vadd.f32 %v963, %v1039
    %v1056 = vadd.f32 %v966, %v1040
    %v1057 = vadd.f32 %v969, %v1041
    %v1058 = vadd.f32 %v972, %v1042
    %v1059 = vadd.f32 %v975, %v1043
    %v1060 = vadd.f32 %v978, %v1044
    %v1061 = vadd.f32 %v981, %v1045
    %v1062 = vmax.f32 %v1054, 0.0
    %v1063 = vmax.f32 %v1055, 0.0
    %v1064 = vmax.f32 %v1056, 0.0
    %v1065 = vmax.f32 %v1057, 0.0
    %v1066 = vmax.f32 %v1058, 0.0
    %v1067 = vmax.f32 %v1059, 0.0
    %v1068 = vmax.f32 %v1060, 0.0
    %v1069 = vmax.f32 %v1061, 0.0
    %v1071 = vperm.slane %v916, 0
    %v1073 = vmul.f32 %v1062, %v1071
    %v1074 = vmul.f32 %v1063, %v1071
    %v1075 = vmul.f32 %v1064, %v1071
    %v1076 = vmul.f32 %v1065, %v1071
    %v1077 = vmul.f32 %v1066, %v1071
    %v1078 = vmul.f32 %v1067, %v1071
    %v1079 = vmul.f32 %v1068, %v1071
    %v1080 = vmul.f32 %v1069, %v1071
    %v1081 = vsel %vm246, %v1073, 0.0
    %1082 = vadd.xlane.f32.xlu0 %v1081
    %v1083 = vpop.xlane.xlu0 %1082
    %v1084 = vsel %vm246, %v1074, 0.0
    %1085 = vadd.xlane.f32.xlu0 %v1084
    %v1086 = vpop.xlane.xlu0 %1085
    %v1087 = vsel %vm246, %v1075, 0.0
    %1088 = vadd.xlane.f32.xlu0 %v1087
    %v1089 = vpop.xlane.xlu0 %1088
    %v1090 = vsel %vm246, %v1076, 0.0
    %1091 = vadd.xlane.f32.xlu0 %v1090
    %v1092 = vpop.xlane.xlu0 %1091
    %v1093 = vsel %vm246, %v1077, 0.0
    %1094 = vadd.xlane.f32.xlu0 %v1093
    %v1095 = vpop.xlane.xlu0 %1094
    %v1096 = vsel %vm246, %v1078, 0.0
    %1097 = vadd.xlane.f32.xlu0 %v1096
    %v1098 = vpop.xlane.xlu0 %1097
    %v1099 = vsel %vm246, %v1079, 0.0
    %1100 = vadd.xlane.f32.xlu0 %v1099
    %v1101 = vpop.xlane.xlu0 %1100
    %v1102 = vsel %vm246, %v1080, 0.0
    %1103 = vadd.xlane.f32.xlu0 %v1102
    %v1104 = vpop.xlane.xlu0 %1103
    %v1106 = vperm.slane %v917, 0
    %1107 = vset.pattern.permute.xlu0 0
    %1108 = vperm.xlu0 %1107, %v1106
    %v1109 = vpop.permute.xlu0 %1108
    %v1111 = vadd.f32 %v1083, %v1109
    %v1112 = vadd.f32 %v1086, %v1109
    %v1113 = vadd.f32 %v1089, %v1109
    %v1114 = vadd.f32 %v1092, %v1109
    %v1115 = vadd.f32 %v1095, %v1109
    %v1116 = vadd.f32 %v1098, %v1109
    %v1117 = vadd.f32 %v1101, %v1109
    %v1118 = vadd.f32 %v1104, %v1109
    %1119 = vset.pattern.permute.xlu0 0
    %1120 = vperm.xlu0 %1119, %v906
    %v1121 = vpop.permute.xlu0 %1120
    %vm1122 = vcmp.lt.s32.totalorder %v104, %v1121
    %v1131 = vperm.slane %v1111, %v104
    %v1132 = vperm.slane %v1112, %v104
    %v1133 = vperm.slane %v1113, %v104
    %v1134 = vperm.slane %v1114, %v104
    %v1135 = vperm.slane %v1115, %v104
    %v1136 = vperm.slane %v1116, %v104
    %v1137 = vperm.slane %v1117, %v104
    %v1138 = vperm.slane %v1118, %v104
    %v1139 = vsel %vm671, %v1132, %v1131
    %v1140 = vsel %vm673, %v1133, %v1139
    %v1141 = vsel %vm675, %v1134, %v1140
    %v1142 = vsel %vm677, %v1135, %v1141
    %v1143 = vsel %vm679, %v1136, %v1142
    %v1144 = vsel %vm681, %v1137, %v1143
    %v1145 = vsel %vm683, %v1138, %v1144
    %v1147 = vsel %vm1122, %v1145, -1e+30
    %v1148 = vsel %vm111, %v1147, -inf
    %1149 = vmax.xlane.f32.xlu0 %v1148
    %v1150 = vpop.xlane.xlu0 %1149
    %v1151 = vsub.f32 %v1147, %v1150
    %v1152 = vmul.f32 %v1151, 1.442695
    %v1153 = vpow.pop %v1152
    %v1154 = vsel %vm111, %v1153, 0.0
    %1155 = vadd.xlane.f32.xlu0 %v1154
    %v1156 = vpop.xlane.xlu0 %1155
    %v1157 = vmax.f32 %v1156, 1e-20
    %v1158 = vrcp.pop %v1157
    %v1159 = vmul.f32 %v1153, %v1158
    %v1161 = vrot.slane %v1159, 1
    %v1162 = vrot.slane %v1159, 2
    %v1163 = vrot.slane %v1159, 3
    %v1164 = vrot.slane %v1159, 4
    %v1165 = vrot.slane %v1159, 5
    %v1166 = vrot.slane %v1159, 6
    %v1167 = vrot.slane %v1159, 7
    %v1168 = vsel %vm111, %v1159, 0
    %1170 = vmatpush.msra.mxu0 0.0
    %1171 = vmatpush.msra.mxu0 0.0
    %1172 = vmatpush.msra.mxu0 0.0
    %1173 = vmatpush.msra.mxu0 0.0
    %1174 = vmatpush.msra.mxu0 0.0
    %1175 = vmatpush.msra.mxu0 0.0
    %1176 = vmatpush.msra.mxu0 0.0
    %1177 = vmatpush.msra.mxu0 0.0
    %1178 = vmatpush.msra.mxu0 0.0
    %1179 = vmatpush.msra.mxu0 0.0
    %1180 = vmatpush.msra.mxu0 0.0
    %1181 = vmatpush.msra.mxu0 0.0
    %1182 = vmatpush.msra.mxu0 0.0
    %1183 = vmatpush.msra.mxu0 0.0
    %1184 = vmatpush.msra.mxu0 0.0
    %1185 = vmatpush.msra.mxu0 %v435
    %1186 = vmatmul.f32.gmra.mxu0 %v1168
    %v1187 = vpop.f32.mrf.mxu0
    %v1188 = vadd.f32 0.0, %v1187
    %1189 = vdwg.mxu0
    %v1190 = vsel %vm111, %v1161, 0
    %1192 = vmatpush.msra.mxu0 0.0
    %1193 = vmatpush.msra.mxu0 0.0
    %1194 = vmatpush.msra.mxu0 0.0
    %1195 = vmatpush.msra.mxu0 0.0
    %1196 = vmatpush.msra.mxu0 0.0
    %1197 = vmatpush.msra.mxu0 0.0
    %1198 = vmatpush.msra.mxu0 0.0
    %1199 = vmatpush.msra.mxu0 0.0
    %1200 = vmatpush.msra.mxu0 0.0
    %1201 = vmatpush.msra.mxu0 0.0
    %1202 = vmatpush.msra.mxu0 0.0
    %1203 = vmatpush.msra.mxu0 0.0
    %1204 = vmatpush.msra.mxu0 0.0
    %1205 = vmatpush.msra.mxu0 0.0
    %1206 = vmatpush.msra.mxu0 0.0
    %1207 = vmatpush.msra.mxu0 %v438
    %1208 = vmatmul.f32.gmra.mxu0 %v1190
    %v1209 = vpop.f32.mrf.mxu0
    %v1210 = vadd.f32 0.0, %v1209
    %1211 = vdwg.mxu0
    %v1212 = vsel %vm111, %v1162, 0
    %1214 = vmatpush.msra.mxu0 0.0
    %1215 = vmatpush.msra.mxu0 0.0
    %1216 = vmatpush.msra.mxu0 0.0
    %1217 = vmatpush.msra.mxu0 0.0
    %1218 = vmatpush.msra.mxu0 0.0
    %1219 = vmatpush.msra.mxu0 0.0
    %1220 = vmatpush.msra.mxu0 0.0
    %1221 = vmatpush.msra.mxu0 0.0
    %1222 = vmatpush.msra.mxu0 0.0
    %1223 = vmatpush.msra.mxu0 0.0
    %1224 = vmatpush.msra.mxu0 0.0
    %1225 = vmatpush.msra.mxu0 0.0
    %1226 = vmatpush.msra.mxu0 0.0
    %1227 = vmatpush.msra.mxu0 0.0
    %1228 = vmatpush.msra.mxu0 0.0
    %1229 = vmatpush.msra.mxu0 %v441
    %1230 = vmatmul.f32.gmra.mxu0 %v1212
    %v1231 = vpop.f32.mrf.mxu0
    %v1232 = vadd.f32 0.0, %v1231
    %1233 = vdwg.mxu0
    %v1234 = vsel %vm111, %v1163, 0
    %1236 = vmatpush.msra.mxu0 0.0
    %1237 = vmatpush.msra.mxu0 0.0
    %1238 = vmatpush.msra.mxu0 0.0
    %1239 = vmatpush.msra.mxu0 0.0
    %1240 = vmatpush.msra.mxu0 0.0
    %1241 = vmatpush.msra.mxu0 0.0
    %1242 = vmatpush.msra.mxu0 0.0
    %1243 = vmatpush.msra.mxu0 0.0
    %1244 = vmatpush.msra.mxu0 0.0
    %1245 = vmatpush.msra.mxu0 0.0
    %1246 = vmatpush.msra.mxu0 0.0
    %1247 = vmatpush.msra.mxu0 0.0
    %1248 = vmatpush.msra.mxu0 0.0
    %1249 = vmatpush.msra.mxu0 0.0
    %1250 = vmatpush.msra.mxu0 0.0
    %1251 = vmatpush.msra.mxu0 %v444
    %1252 = vmatmul.f32.gmra.mxu0 %v1234
    %v1253 = vpop.f32.mrf.mxu0
    %v1254 = vadd.f32 0.0, %v1253
    %1255 = vdwg.mxu0
    %v1256 = vsel %vm111, %v1164, 0
    %1258 = vmatpush.msra.mxu0 0.0
    %1259 = vmatpush.msra.mxu0 0.0
    %1260 = vmatpush.msra.mxu0 0.0
    %1261 = vmatpush.msra.mxu0 0.0
    %1262 = vmatpush.msra.mxu0 0.0
    %1263 = vmatpush.msra.mxu0 0.0
    %1264 = vmatpush.msra.mxu0 0.0
    %1265 = vmatpush.msra.mxu0 0.0
    %1266 = vmatpush.msra.mxu0 0.0
    %1267 = vmatpush.msra.mxu0 0.0
    %1268 = vmatpush.msra.mxu0 0.0
    %1269 = vmatpush.msra.mxu0 0.0
    %1270 = vmatpush.msra.mxu0 0.0
    %1271 = vmatpush.msra.mxu0 0.0
    %1272 = vmatpush.msra.mxu0 0.0
    %1273 = vmatpush.msra.mxu0 %v447
    %1274 = vmatmul.f32.gmra.mxu0 %v1256
    %v1275 = vpop.f32.mrf.mxu0
    %v1276 = vadd.f32 0.0, %v1275
    %1277 = vdwg.mxu0
    %v1278 = vsel %vm111, %v1165, 0
    %1280 = vmatpush.msra.mxu0 0.0
    %1281 = vmatpush.msra.mxu0 0.0
    %1282 = vmatpush.msra.mxu0 0.0
    %1283 = vmatpush.msra.mxu0 0.0
    %1284 = vmatpush.msra.mxu0 0.0
    %1285 = vmatpush.msra.mxu0 0.0
    %1286 = vmatpush.msra.mxu0 0.0
    %1287 = vmatpush.msra.mxu0 0.0
    %1288 = vmatpush.msra.mxu0 0.0
    %1289 = vmatpush.msra.mxu0 0.0
    %1290 = vmatpush.msra.mxu0 0.0
    %1291 = vmatpush.msra.mxu0 0.0
    %1292 = vmatpush.msra.mxu0 0.0
    %1293 = vmatpush.msra.mxu0 0.0
    %1294 = vmatpush.msra.mxu0 0.0
    %1295 = vmatpush.msra.mxu0 %v450
    %1296 = vmatmul.f32.gmra.mxu0 %v1278
    %v1297 = vpop.f32.mrf.mxu0
    %v1298 = vadd.f32 0.0, %v1297
    %1299 = vdwg.mxu0
    %v1300 = vsel %vm111, %v1166, 0
    %1302 = vmatpush.msra.mxu0 0.0
    %1303 = vmatpush.msra.mxu0 0.0
    %1304 = vmatpush.msra.mxu0 0.0
    %1305 = vmatpush.msra.mxu0 0.0
    %1306 = vmatpush.msra.mxu0 0.0
    %1307 = vmatpush.msra.mxu0 0.0
    %1308 = vmatpush.msra.mxu0 0.0
    %1309 = vmatpush.msra.mxu0 0.0
    %1310 = vmatpush.msra.mxu0 0.0
    %1311 = vmatpush.msra.mxu0 0.0
    %1312 = vmatpush.msra.mxu0 0.0
    %1313 = vmatpush.msra.mxu0 0.0
    %1314 = vmatpush.msra.mxu0 0.0
    %1315 = vmatpush.msra.mxu0 0.0
    %1316 = vmatpush.msra.mxu0 0.0
    %1317 = vmatpush.msra.mxu0 %v453
    %1318 = vmatmul.f32.gmra.mxu0 %v1300
    %v1319 = vpop.f32.mrf.mxu0
    %v1320 = vadd.f32 0.0, %v1319
    %1321 = vdwg.mxu0
    %v1322 = vsel %vm111, %v1167, 0
    %1324 = vmatpush.msra.mxu0 0.0
    %1325 = vmatpush.msra.mxu0 0.0
    %1326 = vmatpush.msra.mxu0 0.0
    %1327 = vmatpush.msra.mxu0 0.0
    %1328 = vmatpush.msra.mxu0 0.0
    %1329 = vmatpush.msra.mxu0 0.0
    %1330 = vmatpush.msra.mxu0 0.0
    %1331 = vmatpush.msra.mxu0 0.0
    %1332 = vmatpush.msra.mxu0 0.0
    %1333 = vmatpush.msra.mxu0 0.0
    %1334 = vmatpush.msra.mxu0 0.0
    %1335 = vmatpush.msra.mxu0 0.0
    %1336 = vmatpush.msra.mxu0 0.0
    %1337 = vmatpush.msra.mxu0 0.0
    %1338 = vmatpush.msra.mxu0 0.0
    %1339 = vmatpush.msra.mxu0 %v456
    %1340 = vmatmul.f32.gmra.mxu0 %v1322
    %v1341 = vpop.f32.mrf.mxu0
    %v1342 = vadd.f32 0.0, %v1341
    %1343 = vdwg.mxu0
    %v1345 = vrot.slane %v163, 1
    %v1346 = vrot.slane %v163, 2
    %v1347 = vrot.slane %v163, 3
    %v1348 = vrot.slane %v163, 4
    %v1349 = vrot.slane %v163, 5
    %v1350 = vrot.slane %v163, 6
    %v1351 = vrot.slane %v163, 7
    %v1360 = vadd.f32 %v1188, %v163
    %v1361 = vadd.f32 %v1210, %v1345
    %v1362 = vadd.f32 %v1232, %v1346
    %v1363 = vadd.f32 %v1254, %v1347
    %v1364 = vadd.f32 %v1276, %v1348
    %v1365 = vadd.f32 %v1298, %v1349
    %v1366 = vadd.f32 %v1320, %v1350
    %v1367 = vadd.f32 %v1342, %v1351
    %v1368 = vld [vmem:[%s20] sm:$0xff]
    %v1369 = vld [vmem:[%s20 + $0x8] sm:$0xff]
    %v1370 = vld [vmem:[%s20 + $0x10] sm:$0xff]
    %v1371 = vld [vmem:[%s20 + $0x18] sm:$0xff]
    %v1372 = vld [vmem:[%s21] sm:$0xff]
    %v1373 = vld [vmem:[%s21 + $0x8] sm:$0xff]
    %v1374 = vld [vmem:[%s21 + $0x10] sm:$0xff]
    %v1375 = vld [vmem:[%s21 + $0x18] sm:$0xff]
    %v1376 = vld [vmem:[%s22] sm:$0xff]
    %v1377 = vld [vmem:[%s22 + $0x8] sm:$0xff]
    %v1378 = vld [vmem:[%s22 + $0x10] sm:$0xff]
    %v1379 = vld [vmem:[%s22 + $0x18] sm:$0xff]
    %v1380 = vld [vmem:[%s23] sm:$0x1]
    %v1381 = vld [vmem:[%s24] sm:$0x1]
    %v1382 = vld [vmem:[#allocation4] sm:$0x1]
    %v1383 = vmul.f32 %v1360, %v898
    %v1384 = vmul.f32 %v1361, %v899
    %v1385 = vmul.f32 %v1362, %v900
    %v1386 = vmul.f32 %v1363, %v901
    %v1387 = vmul.f32 %v1364, %v902
    %v1388 = vmul.f32 %v1365, %v903
    %v1389 = vmul.f32 %v1366, %v904
    %v1390 = vmul.f32 %v1367, %v905
    %v1399 = vrot.slane %v1361, 7
    %v1400 = vsel %vm671, %v1399, %v1360
    %v1401 = vrot.slane %v1362, 6
    %v1402 = vsel %vm673, %v1401, %v1400
    %v1403 = vrot.slane %v1363, 5
    %v1404 = vsel %vm675, %v1403, %v1402
    %v1405 = vrot.slane %v1364, 4
    %v1406 = vsel %vm677, %v1405, %v1404
    %v1407 = vrot.slane %v1365, 3
    %v1408 = vsel %vm679, %v1407, %v1406
    %v1409 = vrot.slane %v1366, 2
    %v1410 = vsel %vm681, %v1409, %v1408
    %v1411 = vrot.slane %v1367, 1
    %v1412 = vsel %vm683, %v1411, %v1410
    %v1413 = vsel %vm470, %v1412, 0
    %1415 = vmatpush.msra.mxu0 0.0
    %1416 = vmatpush.msra.mxu0 0.0
    %1417 = vmatpush.msra.mxu0 0.0
    %1418 = vmatpush.msra.mxu0 0.0
    %1419 = vmatpush.msra.mxu0 0.0
    %1420 = vmatpush.msra.mxu0 0.0
    %1421 = vmatpush.msra.mxu0 0.0
    %1422 = vmatpush.msra.mxu0 0.0
    %1423 = vmatpush.msra.mxu0 0.0
    %1424 = vmatpush.msra.mxu0 0.0
    %1425 = vmatpush.msra.mxu0 0.0
    %1426 = vmatpush.msra.mxu0 0.0
    %1427 = vmatpush.msra.mxu0 %v1375
    %1428 = vmatpush.msra.mxu0 %v1374
    %1429 = vmatpush.msra.mxu0 %v1373
    %1430 = vmatpush.msra.mxu0 %v1372
    %1431 = vmatmul.f32.gmra.mxu0 %v1413
    %v1432 = vpop.f32.mrf.mxu0
    %v1433 = vadd.f32 0.0, %v1432
    %1434 = vdwg.mxu0
    %v1443 = vrot.slane %v1384, 7
    %v1444 = vsel %vm671, %v1443, %v1383
    %v1445 = vrot.slane %v1385, 6
    %v1446 = vsel %vm673, %v1445, %v1444
    %v1447 = vrot.slane %v1386, 5
    %v1448 = vsel %vm675, %v1447, %v1446
    %v1449 = vrot.slane %v1387, 4
    %v1450 = vsel %vm677, %v1449, %v1448
    %v1451 = vrot.slane %v1388, 3
    %v1452 = vsel %vm679, %v1451, %v1450
    %v1453 = vrot.slane %v1389, 2
    %v1454 = vsel %vm681, %v1453, %v1452
    %v1455 = vrot.slane %v1390, 1
    %v1456 = vsel %vm683, %v1455, %v1454
    %v1457 = vsel %vm470, %v1456, 0
    %1459 = vmatpush.msra.mxu0 0.0
    %1460 = vmatpush.msra.mxu0 0.0
    %1461 = vmatpush.msra.mxu0 0.0
    %1462 = vmatpush.msra.mxu0 0.0
    %1463 = vmatpush.msra.mxu0 0.0
    %1464 = vmatpush.msra.mxu0 0.0
    %1465 = vmatpush.msra.mxu0 0.0
    %1466 = vmatpush.msra.mxu0 0.0
    %1467 = vmatpush.msra.mxu0 0.0
    %1468 = vmatpush.msra.mxu0 0.0
    %1469 = vmatpush.msra.mxu0 0.0
    %1470 = vmatpush.msra.mxu0 0.0
    %1471 = vmatpush.msra.mxu0 %v1371
    %1472 = vmatpush.msra.mxu0 %v1370
    %1473 = vmatpush.msra.mxu0 %v1369
    %1474 = vmatpush.msra.mxu0 %v1368
    %1475 = vmatmul.f32.gmra.mxu0 %v1457
    %v1476 = vpop.f32.mrf.mxu0
    %v1477 = vadd.f32 %v1433, %v1476
    %1478 = vdwg.mxu0
    %1479 = vmatpush.msra.mxu0 0.0
    %1480 = vmatpush.msra.mxu0 0.0
    %1481 = vmatpush.msra.mxu0 0.0
    %1482 = vmatpush.msra.mxu0 0.0
    %1483 = vmatpush.msra.mxu0 0.0
    %1484 = vmatpush.msra.mxu0 0.0
    %1485 = vmatpush.msra.mxu0 0.0
    %1486 = vmatpush.msra.mxu0 0.0
    %1487 = vmatpush.msra.mxu0 0.0
    %1488 = vmatpush.msra.mxu0 0.0
    %1489 = vmatpush.msra.mxu0 0.0
    %1490 = vmatpush.msra.mxu0 0.0
    %1491 = vmatpush.msra.mxu0 %v1379
    %1492 = vmatpush.msra.mxu0 %v1378
    %1493 = vmatpush.msra.mxu0 %v1377
    %1494 = vmatpush.msra.mxu0 %v1376
    %1495 = vmatmul.f32.gmra.mxu0 %v1008
    %v1496 = vpop.f32.mrf.mxu0
    %v1497 = vadd.f32 0.0, %v1496
    %1498 = vdwg.mxu0
    %v1499 = vadd.f32 %v1477, %v1497
    %v1501 = vperm.slane %v1380, 0
    %v1503 = vadd.f32 %v1499, %v1501
    %v1504 = vmax.f32 %v1503, 0.0
    %1506 = vset.pattern.permute.xlu0 0
    %1507 = vperm.xlu0 %1506, %v1382
    %v1508 = vpop.permute.xlu0 %1507
    %v1510 = vperm.slane %v1508, 0
    %v1512 = vsel %vm111, %v1381, 0
    %v1515 = vsel %vm111, %v1504, 0
    %1517 = vmatpush.xpose.msra.mxu0 0.0
    %1518 = vmatpush.xpose.msra.mxu0 0.0
    %1519 = vmatpush.xpose.msra.mxu0 0.0
    %1520 = vmatpush.xpose.msra.mxu0 0.0
    %1521 = vmatpush.xpose.msra.mxu0 0.0
    %1522 = vmatpush.xpose.msra.mxu0 0.0
    %1523 = vmatpush.xpose.msra.mxu0 0.0
    %1524 = vmatpush.xpose.msra.mxu0 0.0
    %1525 = vmatpush.xpose.msra.mxu0 0.0
    %1526 = vmatpush.xpose.msra.mxu0 0.0
    %1527 = vmatpush.xpose.msra.mxu0 0.0
    %1528 = vmatpush.xpose.msra.mxu0 0.0
    %1529 = vmatpush.xpose.msra.mxu0 0.0
    %1530 = vmatpush.xpose.msra.mxu0 0.0
    %1531 = vmatpush.xpose.msra.mxu0 0.0
    %1532 = vmatpush.xpose.msra.mxu0 %v1515
    %1533 = vmatmul.f32.gmra.mxu0 %v1512
    %v1534 = vpop.f32.mrf.mxu0
    %v1535 = vadd.f32 %v1510, %v1534
    %1536 = vdwg.mxu0
    %v1537 = vand.u32 2147483647, %v1535
    %v1538 = vsub.f32 0.0, %v1537
    %v1539 = vmul.f32 %v1538, 1.442695
    %v1540 = vpow.pop %v1539
    %v1541 = vadd.f32 %v1540, 1.0
    %v1542 = vrcp.pop %v1541
    %v1543 = vmul.f32 %v1541, %v1542
    %v1544 = vsub.f32 1.0, %v1543
    %v1545 = vmul.f32 %v1542, %v1544
    %v1546 = vadd.f32 %v1542, %v1545
    %vm1547 = vweird.f32 %v1541
    %vm1548 = vweird.f32 %v1542
    %vm1549 = vmor %vm1547, %vm1548
    %v1550 = vsel %vm1549, %v1542, %v1546
    %v1551 = vand.u32 2147483647, %v1541
    %vm1552 = vcmp.eq.f32.partialorder %v1551, 8.507059e+37
    %v1553 = vand.u32 %v1541, 2147483648
    %v1554 = vor.u32 1.1754944e-38, %v1553
    %v1555 = vsel %vm1552, %v1554, %v1550
    %v1556 = vmul.f32 1.0, %v1555
    %vm1557 = vcmp.ge.f32.partialorder %v1535, 0.0
    %v1558 = vmul.f32 %v1540, %v1556
    %v1559 = vsel %vm1557, %v1556, %v1558
    %vm1560 = vcmask 57344
    %1561 = vst.msk [vmem:[#allocation5] sm:$0x1] %vm1560, %v1559
    // Predicated region
    $region106: #{_grp_device.1} parent=1 // pred_check
      _
    $region107: #{_grp_device.1} parent=1 // pred_check_branch
      %1563 = sbr.rel (0) target = $region109
    $region108: #{_grp_device.1} parent=1 // pred_region
      %1565 = vsyncadd [#allocation6], 0
      %s1567 = sshll.u32 [#allocation5], 4
      %s1568 = int_to_ptr.vmem [resolvable:$true] %s1567
      %s1569 = sshll.u32 %s26, 4
      %s1570 = int_to_ptr.hbm [resolvable:$true] %s1569
      %1572 = dma.vmem_to_hbm [thread:$0]  %s1568, 16, %s1570, [#allocation6]
    $region109: #{_grp_device.1} parent=1 // pred_fallthru
      _
    // Predicated region
    $region110: #{_grp_device.1} parent=1 // pred_check
      _
    $region111: #{_grp_device.1} parent=1 // pred_check_branch
      %1574 = sbr.rel (0) target = $region113
    $region112: #{_grp_device.1} parent=1 // pred_region
      %1576 = dma.done [#allocation6], 16
    $region113: #{_grp_device.1} parent=1 // pred_fallthru
      _
    %1577 = vsyncpa [#allocation6], 1

</llo_original>
